<compile_context>
chip_gen: v7x
topology: tpu7x:2x2x1
jax: 0.10.0
libtpu: 0.0.40
codegen_flags: <defaults>
</compile_context>

<pallas_src>
import math

import jax
import jax.numpy as jnp
from jax.experimental import pallas as pl
from jax.experimental.pallas import tpu as pltpu


def _round_up(x, m):
    return ((x + m - 1) // m) * m


def _padded_bytes(shape, dtype):
    """Physical VMEM footprint: last dim -> x128 lanes, 2nd-last -> x8 sublanes."""
    s = list(shape)
    s[-1] = _round_up(s[-1], 128)
    if len(s) >= 2:
        s[-2] = _round_up(s[-2], 8)
    n = 1
    for d in s:
        n *= d
    return n * jnp.dtype(dtype).itemsize


def _block_spec(shape, index_map, single_buffer=False):
    """BlockSpec, optionally single-buffered (for operands whose index_map is
    constant along the inner grid axis).  Falls back to the default
    double-buffered spec on JAX builds without pipeline_mode support."""
    if single_buffer and hasattr(pl, "Buffered"):
        try:
            return pl.BlockSpec(shape, index_map, pipeline_mode=pl.Buffered(1))
        except TypeError:  # older BlockSpec signature
            pass
    return pl.BlockSpec(shape, index_map)


def _make_fold_kernel(th, bh, Wo_pad, KH, KW, C, Opad):
    """One MXU GEMM per output tile with K = KH*KW*C (im2col assembled in VMEM)."""
    M = th * Wo_pad

    def kernel(x_ref, w_ref, b_ref, o_ref, lhs_ref):
        # x_ref: (1, Hp_pad, Wp_pad, C)  padded image, resident across row tiles
        # w_ref: (KH*KW*C, Opad)         folded weights (O padded to 128 lanes)
        # b_ref: (1, Opad) f32
        # o_ref: (1, th, Wo_pad, Opad)   lane-dense NHWC output tile
        # lhs_ref: (M, KH*KW*C)          VMEM scratch for the folded im2col LHS
        i = pl.program_id(1)
        band = x_ref[0, pl.ds(i * th, bh), :, :]               # (bh, Wp_pad, C)
        for kh in range(KH):
            for kw in range(KW):
                t = kh * KW + kw
                win = band[kh:kh + th, kw:kw + Wo_pad, :]      # (th, Wo_pad, C)
                # Wo_pad % 8 == 0 -> this reshape is a free (layout-compatible) collapse.
                lhs_ref[:, t * C:(t + 1) * C] = win.reshape(M, C)
        # Single big GEMM: K = KH*KW*C instead of KH*KW GEMMs with K = C.
        out = jnp.dot(lhs_ref[...], w_ref[...], preferred_element_type=jnp.float32)
        out = out + b_ref[...].astype(jnp.float32)             # (1, Opad) broadcast
        o_ref[0] = out.reshape(th, Wo_pad, Opad).astype(o_ref.dtype)

    return kernel


def _make_pertap_kernel(th, bh, Wo_pad, KH, KW, C, Opad):
    """KH*KW shifted GEMMs accumulated into a bias-initialized f32 VMEM scratch.
    Used when C >= 128 (the MXU contraction is already well fed per tap)."""
    M = th * Wo_pad

    def kernel(x_ref, w_ref, b_ref, o_ref, acc_ref):
        i = pl.program_id(1)
        band = x_ref[0, pl.ds(i * th, bh), :, :]               # (bh, Wp_pad, C)
        # Bias-initialized accumulator: saves a separate epilogue add and keeps
        # the running sum in VMEM instead of the 64-vreg file.
        acc_ref[...] = jnp.broadcast_to(b_ref[...].astype(jnp.float32), (M, Opad))
        for kh in range(KH):
            for kw in range(KW):
                win = band[kh:kh + th, kw:kw + Wo_pad, :].reshape(M, C)
                acc_ref[...] += jnp.dot(win, w_ref[kh * KW + kw],
                                        preferred_element_type=jnp.float32)
        o_ref[0] = acc_ref[...].reshape(th, Wo_pad, Opad).astype(o_ref.dtype)

    return kernel


def absorbing_conv2d(x, weight, bias=None, padding=1, compute_dtype=None,
                     fold_taps=None, tile_rows_target=1024):
    """AbsorbingConv2d forward (stride=1, dilation=1, groups=1).

    x: (N, C, H, W), weight: (O, C, KH, KW), bias: (O,) or None.
    Returns (N, O, Ho, Wo), Ho = H + 2*padding - KH + 1 (== H for k=3, p=1).

    compute_dtype: optional GEMM dtype for activations/weights (jnp.bfloat16 is
    recommended on v6e/v7x); accumulation is always float32.
    fold_taps: fold KH*KW taps into the contraction dim (default: C < 128).
    """
    p = int(padding)
    N, C, H, W = x.shape
    O_ch, Cw, KH, KW = weight.shape
    assert Cw == C, "grouped conv not supported by this kernel"
    assert p >= 1, "AbsorbingConv2d semantics need padding >= 1"
    assert p < H and p < W, "reflect padding requires padding < H and padding < W"

    Hp, Wp = H + 2 * p, W + 2 * p
    Ho, Wo = Hp - KH + 1, Wp - KW + 1
    assert Ho >= 1 and Wo >= 1

    # --- Absorbing pad: reflect, negate, restore interior (NCHW -> NHWC once).
    # Hoisted out of the kernel: XLA fuses the negate/select into the reflect
    # gather, so the kernel spends zero VPU ops on border masks.  The flip
    # happens before any bf16 cast (v5e has no bf16 VALU).
    x_nhwc = jnp.transpose(x, (0, 2, 3, 1))
    xr = jnp.pad(x_nhwc, ((0, 0), (p, p), (p, p), (0, 0)), mode="reflect")
    xr = -xr
    xr = xr.at[:, p:-p, p:-p, :].set(x_nhwc)

    cdtype = jnp.dtype(x.dtype if compute_dtype is None else compute_dtype)
    xr = xr.astype(cdtype)
    w = weight.astype(cdtype)

    # --- Alignment padding.
    Opad = _round_up(max(O_ch, 1), 128)      # lane-dense output / full MXU N
    # TODO(synk): for tiny O_ch this writes Opad/O_ch x the real output bytes to
    #             HBM; a Wo-on-lanes output layout would fix small-O layers.
    Wo_pad = _round_up(Wo, 8)                # sublane-aligned GEMM M, free reshapes
    Wp_pad = Wo_pad + KW - 1
    th = max(1, min(Ho, tile_rows_target // Wo_pad))   # GEMM M = th*Wo_pad ~ 1k
    n_h = pl.cdiv(Ho, th)
    Ho_pad = n_h * th
    Hp_pad = Ho_pad + KH - 1
    bh = th + KH - 1
    M = th * Wo_pad

    xr = jnp.pad(xr, ((0, 0), (0, Hp_pad - Hp), (0, Wp_pad - Wp), (0, 0)))

    if fold_taps is None:
        fold_taps = C < 128                  # per-tap K=C underfeeds the MXU below ~128
    Kc = KH * KW * C

    # --- Weights / bias prep (K ordering = (kh, kw, c) to match the LHS assembly).
    w_t = jnp.transpose(w, (2, 3, 1, 0))     # (KH, KW, C, O)
    if fold_taps:
        w_in = jnp.pad(w_t.reshape(Kc, O_ch), ((0, 0), (0, Opad - O_ch)))
        w_block = (Kc, Opad)
        w_index = lambda n, i: (0, 0)
        kernel = _make_fold_kernel(th, bh, Wo_pad, KH, KW, C, Opad)
        scratch = pltpu.VMEM((M, Kc), cdtype)             # folded im2col LHS
    else:
        w_in = jnp.pad(w_t.reshape(KH * KW, C, O_ch),
                       ((0, 0), (0, 0), (0, Opad - O_ch)))
        w_block = (KH * KW, C, Opad)
        w_index = lambda n, i: (0, 0, 0)
        kernel = _make_pertap_kernel(th, bh, Wo_pad, KH, KW, C, Opad)
        scratch = pltpu.VMEM((M, Opad), jnp.float32)      # f32 accumulator

    if bias is None:
        b_in = jnp.zeros((1, Opad), jnp.float32)
    else:
        b_in = jnp.pad(bias.astype(jnp.float32), (0, Opad - O_ch)).reshape(1, Opad)

    # --- Specs.  Weights/bias (and the image, when resident across >1 row tiles)
    # have index_maps constant along the inner axis -> single-buffer them.
    x_single = n_h > 1
    in_specs = [
        _block_spec((1, Hp_pad, Wp_pad, C), lambda n, i: (n, 0, 0, 0), x_single),
        _block_spec(w_block, w_index, True),
        _block_spec((1, Opad), lambda n, i: (0, 0), True),
    ]
    out_spec = pl.BlockSpec((1, th, Wo_pad, Opad), lambda n, i: (n, i, 0, 0))

    # --- Explicit VMEM budget sized to the actual resident buffers (+ margin) so
    # the default 16/32 MiB scoped limit doesn't reject realistic shapes.
    resident = (
        _padded_bytes((Hp_pad, Wp_pad, C), cdtype) * (1 if x_single else 2)
        + _padded_bytes(w_block, cdtype)
        + _padded_bytes((1, Opad), jnp.float32)
        + _padded_bytes((th, Wo_pad, Opad), x.dtype) * 2
        + _padded_bytes((bh, Wp_pad, C), cdtype)              # in-kernel band temp
        + _padded_bytes((M, Kc if fold_taps else Opad),
                        cdtype if fold_taps else jnp.float32)  # scratch
        + _padded_bytes((M, Opad), jnp.float32)               # f32 GEMM result
    )
    vmem_limit = int(min(max(resident * 3 // 2 + (8 << 20), 32 << 20), 128 << 20))

    out_pad = pl.pallas_call(
        kernel,
        out_shape=jax.ShapeDtypeStruct((N, Ho_pad, Wo_pad, Opad), x.dtype),
        grid_spec=pltpu.PrefetchScalarGridSpec(
            num_scalar_prefetch=0,
            grid=(N, n_h),
            in_specs=in_specs,
            out_specs=out_spec,
            scratch_shapes=[scratch],
        ),
        compiler_params=pltpu.CompilerParams(
            # Both axes write disjoint output tiles and carry no state ->
            # shard either across v7x's two TensorCores (helps even at N=1).
            dimension_semantics=("parallel", "parallel"),
            vmem_limit_bytes=vmem_limit,
        ),
    )(xr, w_in, b_in)

    # Drop alignment padding; one transpose back to the public NCHW layout.
    return jnp.transpose(out_pad[:, :Ho, :Wo, :O_ch], (0, 3, 1, 2))


# Pure-JAX reference for correctness checking.
def reference_absorbing_conv2d(x, weight, bias, p):
    xr = jnp.pad(x, ((0, 0), (0, 0), (p, p), (p, p)), mode="reflect")
    xp = -xr
    xp = xp.at[:, :, p:-p, p:-p].set(x)
    out = jax.lax.conv_general_dilated(
        xp, weight, window_strides=(1, 1), padding="VALID",
        dimension_numbers=("NCHW", "OIHW", "NCHW"),
    )
    return out + bias[None, :, None, None]


if __name__ == "__main__":
    key = jax.random.PRNGKey(0)
    k_x, k_w, k_b = jax.random.split(key, 3)

    # Small shapes consistent with the module (kernel_size=3, padding=1).
    N, C, H, W = 2, 4, 16, 16
    O_ch, K, pad = 8, 3, 1

    x = jax.random.normal(k_x, (N, C, H, W), dtype=jnp.float32)

    # Deterministic init mimicking nn.Conv2d defaults (kaiming-uniform-ish bounds).
    fan_in = C * K * K
    bound = 1.0 / math.sqrt(fan_in)
    weight = jax.random.uniform(k_w, (O_ch, C, K, K), jnp.float32, -bound, bound)
    bias = jax.random.uniform(k_b, (O_ch,), jnp.float32, -bound, bound)

    ref = reference_absorbing_conv2d(x, weight, bias, pad)

    fwd = jax.jit(absorbing_conv2d,
                  static_argnames=("padding", "compute_dtype", "fold_taps",
                                   "tile_rows_target"))

    # Folded-taps path (single GEMM with K = KH*KW*C) — default for small C.
    out = jax.block_until_ready(fwd(x, weight, bias, padding=pad))
    assert out.shape == (N, O_ch, H, W), out.shape
    assert jnp.allclose(out, ref, atol=1e-4, rtol=1e-4), "fold path mismatch"

    # Per-tap GEMM path (auto-selected when C >= 128) — exercised here for coverage.
    out_loop = jax.block_until_ready(fwd(x, weight, bias, padding=pad,
                                         fold_taps=False))
    assert jnp.allclose(out_loop, ref, atol=1e-4, rtol=1e-4), "per-tap path mismatch"

    # bf16 compute with f32 accumulation — the recommended v6e/v7x configuration.
    out_bf16 = jax.block_until_ready(fwd(x, weight, bias, padding=pad,
                                         compute_dtype=jnp.bfloat16))
    assert jnp.allclose(out_bf16, ref, atol=1e-1, rtol=5e-2), "bf16 path mismatch"

    print("KERNEL_OK")
</pallas_src>

<mosaic_0001>
module attributes {stable_mosaic.version = 11 : i64} {
  func.func @kernel(%arg0: i32, %arg1: i32, %arg2: memref<1x18x18x4xf32, #tpu.memory_space<vmem>>, %arg3: memref<36x128xf32, #tpu.memory_space<vmem>>, %arg4: memref<1x128xf32, #tpu.memory_space<vmem>>, %arg5: memref<1x16x16x128xf32, #tpu.memory_space<vmem>>, %arg6: memref<256x36xf32, #tpu.memory_space<vmem>>) attributes {dimension_semantics = [#tpu.dimension_semantics<parallel>, #tpu.dimension_semantics<parallel>], iteration_bounds = array<i64: 2, 1>, scalar_prefetch = 0 : i64, scratch_operands = 1 : i64, tpu.core_type = #tpu.core_type<tc>, window_params = [{transform_indices = @transform_0, window_bounds = array<i64: 1, 18, 18, 4>}, {pipeline_mode = #tpu.pipeline_mode<synchronous>, transform_indices = @transform_1, window_bounds = array<i64: 36, 128>}, {pipeline_mode = #tpu.pipeline_mode<synchronous>, transform_indices = @transform_2, window_bounds = array<i64: 1, 128>}, {transform_indices = @transform_3, window_bounds = array<i64: 1, 16, 16, 128>}]} {
    %c16_i32 = arith.constant 16 : i32
    %0 = arith.muli %arg1, %c16_i32 : i32
    %c0 = arith.constant 0 : index
    %1 = arith.index_cast %0 : i32 to index
    %c0_0 = arith.constant 0 : index
    %c0_1 = arith.constant 0 : index
    %2 = vector.load %arg2[%c0, %1, %c0_0, %c0_1] : memref<1x18x18x4xf32, #tpu.memory_space<vmem>>, vector<1x18x18x4xf32>
    %3 = vector.shape_cast %2 : vector<1x18x18x4xf32> to vector<18x18x4xf32>
    %4 = vector.extract_strided_slice %3 {offsets = [0, 0, 0], sizes = [16, 16, 4], strides = [1, 1, 1]} : vector<18x18x4xf32> to vector<16x16x4xf32>
    %5 = vector.shape_cast %4 : vector<16x16x4xf32> to vector<256x4xf32>
    %c0_2 = arith.constant 0 : index
    %c0_3 = arith.constant 0 : index
    %6 = vector.load %arg6[%c0_2, %c0_3] : memref<256x36xf32, #tpu.memory_space<vmem>>, vector<256x4xf32>
    tpu.vector_store %arg6[%c0_2, %c0_3], %5 {strides = array<i32>} : memref<256x36xf32, #tpu.memory_space<vmem>>, vector<256x4xf32>,
    %7 = vector.extract_strided_slice %3 {offsets = [0, 1, 0], sizes = [16, 16, 4], strides = [1, 1, 1]} : vector<18x18x4xf32> to vector<16x16x4xf32>
    %8 = vector.shape_cast %7 : vector<16x16x4xf32> to vector<256x4xf32>
    %c0_4 = arith.constant 0 : index
    %c4 = arith.constant 4 : index
    %9 = vector.load %arg6[%c0_4, %c4] : memref<256x36xf32, #tpu.memory_space<vmem>>, vector<256x4xf32>
    tpu.vector_store %arg6[%c0_4, %c4], %8 {strides = array<i32>} : memref<256x36xf32, #tpu.memory_space<vmem>>, vector<256x4xf32>,
    %10 = vector.extract_strided_slice %3 {offsets = [0, 2, 0], sizes = [16, 16, 4], strides = [1, 1, 1]} : vector<18x18x4xf32> to vector<16x16x4xf32>
    %11 = vector.shape_cast %10 : vector<16x16x4xf32> to vector<256x4xf32>
    %c0_5 = arith.constant 0 : index
    %c8 = arith.constant 8 : index
    %12 = vector.load %arg6[%c0_5, %c8] : memref<256x36xf32, #tpu.memory_space<vmem>>, vector<256x4xf32>
    tpu.vector_store %arg6[%c0_5, %c8], %11 {strides = array<i32>} : memref<256x36xf32, #tpu.memory_space<vmem>>, vector<256x4xf32>,
    %13 = vector.extract_strided_slice %3 {offsets = [1, 0, 0], sizes = [16, 16, 4], strides = [1, 1, 1]} : vector<18x18x4xf32> to vector<16x16x4xf32>
    %14 = vector.shape_cast %13 : vector<16x16x4xf32> to vector<256x4xf32>
    %c0_6 = arith.constant 0 : index
    %c12 = arith.constant 12 : index
    %15 = vector.load %arg6[%c0_6, %c12] : memref<256x36xf32, #tpu.memory_space<vmem>>, vector<256x4xf32>
    tpu.vector_store %arg6[%c0_6, %c12], %14 {strides = array<i32>} : memref<256x36xf32, #tpu.memory_space<vmem>>, vector<256x4xf32>,
    %16 = vector.extract_strided_slice %3 {offsets = [1, 1, 0], sizes = [16, 16, 4], strides = [1, 1, 1]} : vector<18x18x4xf32> to vector<16x16x4xf32>
    %17 = vector.shape_cast %16 : vector<16x16x4xf32> to vector<256x4xf32>
    %c0_7 = arith.constant 0 : index
    %c16 = arith.constant 16 : index
    %18 = vector.load %arg6[%c0_7, %c16] : memref<256x36xf32, #tpu.memory_space<vmem>>, vector<256x4xf32>
    tpu.vector_store %arg6[%c0_7, %c16], %17 {strides = array<i32>} : memref<256x36xf32, #tpu.memory_space<vmem>>, vector<256x4xf32>,
    %19 = vector.extract_strided_slice %3 {offsets = [1, 2, 0], sizes = [16, 16, 4], strides = [1, 1, 1]} : vector<18x18x4xf32> to vector<16x16x4xf32>
    %20 = vector.shape_cast %19 : vector<16x16x4xf32> to vector<256x4xf32>
    %c0_8 = arith.constant 0 : index
    %c20 = arith.constant 20 : index
    %21 = vector.load %arg6[%c0_8, %c20] : memref<256x36xf32, #tpu.memory_space<vmem>>, vector<256x4xf32>
    tpu.vector_store %arg6[%c0_8, %c20], %20 {strides = array<i32>} : memref<256x36xf32, #tpu.memory_space<vmem>>, vector<256x4xf32>,
    %22 = vector.extract_strided_slice %3 {offsets = [2, 0, 0], sizes = [16, 16, 4], strides = [1, 1, 1]} : vector<18x18x4xf32> to vector<16x16x4xf32>
    %23 = vector.shape_cast %22 : vector<16x16x4xf32> to vector<256x4xf32>
    %c0_9 = arith.constant 0 : index
    %c24 = arith.constant 24 : index
    %24 = vector.load %arg6[%c0_9, %c24] : memref<256x36xf32, #tpu.memory_space<vmem>>, vector<256x4xf32>
    tpu.vector_store %arg6[%c0_9, %c24], %23 {strides = array<i32>} : memref<256x36xf32, #tpu.memory_space<vmem>>, vector<256x4xf32>,
    %25 = vector.extract_strided_slice %3 {offsets = [2, 1, 0], sizes = [16, 16, 4], strides = [1, 1, 1]} : vector<18x18x4xf32> to vector<16x16x4xf32>
    %26 = vector.shape_cast %25 : vector<16x16x4xf32> to vector<256x4xf32>
    %c0_10 = arith.constant 0 : index
    %c28 = arith.constant 28 : index
    %27 = vector.load %arg6[%c0_10, %c28] : memref<256x36xf32, #tpu.memory_space<vmem>>, vector<256x4xf32>
    tpu.vector_store %arg6[%c0_10, %c28], %26 {strides = array<i32>} : memref<256x36xf32, #tpu.memory_space<vmem>>, vector<256x4xf32>,
    %28 = vector.extract_strided_slice %3 {offsets = [2, 2, 0], sizes = [16, 16, 4], strides = [1, 1, 1]} : vector<18x18x4xf32> to vector<16x16x4xf32>
    %29 = vector.shape_cast %28 : vector<16x16x4xf32> to vector<256x4xf32>
    %c0_11 = arith.constant 0 : index
    %c32 = arith.constant 32 : index
    %30 = vector.load %arg6[%c0_11, %c32] : memref<256x36xf32, #tpu.memory_space<vmem>>, vector<256x4xf32>
    tpu.vector_store %arg6[%c0_11, %c32], %29 {strides = array<i32>} : memref<256x36xf32, #tpu.memory_space<vmem>>, vector<256x4xf32>,
    %c0_12 = arith.constant 0 : index
    %c0_13 = arith.constant 0 : index
    %31 = vector.load %arg6[%c0_12, %c0_13] : memref<256x36xf32, #tpu.memory_space<vmem>>, vector<256x36xf32>
    %c0_14 = arith.constant 0 : index
    %c0_15 = arith.constant 0 : index
    %32 = vector.load %arg3[%c0_14, %c0_15] : memref<36x128xf32, #tpu.memory_space<vmem>>, vector<36x128xf32>
    %cst = arith.constant dense<0.000000e+00> : vector<256x128xf32>
    %33 = tpu.matmul %31, %32, %cst {dimension_numbers = #tpu.dot_dimension_numbers<[1], [0], [0], [1], [0, 0, 1, 1], [], []>} : vector<256x36xf32>, vector<36x128xf32>, vector<256x128xf32> -> vector<256x128xf32>
    %c0_16 = arith.constant 0 : index
    %c0_17 = arith.constant 0 : index
    %34 = vector.load %arg4[%c0_16, %c0_17] : memref<1x128xf32, #tpu.memory_space<vmem>>, vector<1x128xf32>
    %35 = vector.broadcast %34 : vector<1x128xf32> to vector<256x128xf32>
    %36 = arith.addf %33, %35 : vector<256x128xf32>
    %37 = vector.shape_cast %36 : vector<256x128xf32> to vector<16x16x128xf32>
    %c0_18 = arith.constant 0 : index
    %c0_19 = arith.constant 0 : index
    %c0_20 = arith.constant 0 : index
    %c0_21 = arith.constant 0 : index
    %38 = vector.load %arg5[%c0_18, %c0_19, %c0_20, %c0_21] : memref<1x16x16x128xf32, #tpu.memory_space<vmem>>, vector<1x16x16x128xf32>
    %39 = vector.shape_cast %38 : vector<1x16x16x128xf32> to vector<16x16x128xf32>
    %40 = vector.shape_cast %37 : vector<16x16x128xf32> to vector<1x16x16x128xf32>
    tpu.vector_store %arg5[%c0_18, %c0_19, %c0_20, %c0_21], %40 {strides = array<i32>} : memref<1x16x16x128xf32, #tpu.memory_space<vmem>>, vector<1x16x16x128xf32>,
    return
  }
  func.func @transform_0(%arg0: i32, %arg1: i32) -> (i32, i32, i32, i32) {
    %c0_i32 = arith.constant 0 : i32
    %c0_i32_0 = arith.constant 0 : i32
    %c0_i32_1 = arith.constant 0 : i32
    %c0_i32_2 = arith.constant 0 : i32
    return %arg0, %c0_i32, %c0_i32_0, %c0_i32_1 : i32, i32, i32, i32
  }
  func.func @transform_1(%arg0: i32, %arg1: i32) -> (i32, i32) {
    %c0_i32 = arith.constant 0 : i32
    %c0_i32_0 = arith.constant 0 : i32
    %c0_i32_1 = arith.constant 0 : i32
    return %c0_i32, %c0_i32_0 : i32, i32
  }
  func.func @transform_2(%arg0: i32, %arg1: i32) -> (i32, i32) {
    %c0_i32 = arith.constant 0 : i32
    %c0_i32_0 = arith.constant 0 : i32
    %c0_i32_1 = arith.constant 0 : i32
    return %c0_i32, %c0_i32_0 : i32, i32
  }
  func.func @transform_3(%arg0: i32, %arg1: i32) -> (i32, i32, i32, i32) {
    %c0_i32 = arith.constant 0 : i32
    %c0_i32_0 = arith.constant 0 : i32
    %c0_i32_1 = arith.constant 0 : i32
    return %arg0, %arg1, %c0_i32, %c0_i32_0 : i32, i32, i32, i32
  }
}

</mosaic_0001>

<llo_original>
// kernel: absorbing_conv2d.1
$region0: #{absorbing_conv2d.1}
  #allocation0 [shape = 'u32[]', space=smem, size = 0x4, offset = 0x4, fixed_abs, tag = 'smem constant byte address 0x4 - core index']
  #allocation1 [shape = 'u32[144,128]{1,0:T(1,128)}', space=vmem, size = 0x12000, scoped, tag = 'internal scratch']
  #allocation2 [shape = 'f32[256,36]{1,0:T(8,128)}', space=vmem, size = 0x20000, scoped, tag = 'scratch operand']
  %s0 = inlined_call_operand.vmem [shape: f32[2,18,18,4], index: 0, kind: input, shape index: {}]
  %s1 = inlined_call_operand.vmem [shape: f32[36,128], index: 1, kind: input, shape index: {}]
  %s2 = inlined_call_operand.vmem [shape: f32[1,128], index: 2, kind: input, shape index: {}]
  %s3 = inlined_call_operand.vmem [shape: f32[2,16,16,128], index: 3, kind: output, shape index: {}]
  %s4 = sld [smem:[#allocation0]]
  $region45: #{absorbing_conv2d.1} parent=0
    _
  %s6 = ssub.s32 1, %s4
  %s7 = scalar_select 0, %s6, %s4
  loop: start=0, step=1, limit=4
  $region2: #{absorbing_conv2d.1} parent=0 // loop_pre_header
    _
  $region3: #{absorbing_conv2d.1} parent=0 // loop_header
    %s9 = sphi 0, %s13
    %p10 = scmp.ge.s32.totalorder %s9, 4
    %s16 = sphi 0, %s28
    %s17 = sphi 0, %s24
    %s18 = sphi 0, %s16
    %s19 = sphi 0, %s17
    %s20 = sphi 0, %s18
    %s21 = sphi 0, %s19
    %s31 = sphi 0, %s33
    %s34 = sphi 0, %s31
    %s35 = sphi 0, %s34
    %s51 = sphi 0, %s35
    %s55 = sphi 0, %s55
    %s57 = sphi 0, %s55
    %s58 = sphi 0, %s57
    %s72 = sphi 0, %s58
    %s76 = sphi 0, %s76
    %s78 = sphi 0, %s76
    %s79 = sphi 0, %s78
    %s93 = sphi 0, %s79
    %s101 = sphi 0, %s103
    %s104 = sphi 0, %s101
    %s105 = sphi 0, %s104
    %s121 = sphi 0, %s105
  $region4: #{absorbing_conv2d.1} parent=0 // loop_header_branch
    %12 = sbr.rel (%p10) target = $region8
  $region5: #{absorbing_conv2d.1} parent=0 // loop_body
    %s14 = ssub.s32 %s9, 1
    %s15 = ssub.s32 %s9, 2
    %s22 = sadd.s32 1, %s17
    %p23 = scmp.ge.s32.totalorder %s22, 1
    %s24 = scalar_select %p23, 0, %s22
    %s25 = sadd.s32 1, %s16
    %s26 = scalar_select %p23, %s25, %s16
    %p27 = scmp.ge.s32.totalorder %s26, 2
    %s28 = scalar_select %p27, 0, %s26
    %s29 = ssub.s32 %s16, %s28
    %p30 = scmp.eq.s32.totalorder %s29, 0
    %s32 = sadd.s32 %s31, 1
    %s33 = scalar_select %p30, %s31, %s32
    %p36 = pneg %p30
    %p37 = scmp.eq.s32.totalorder %s9, 1
    %p38 = por %p36, %p37
    %p39 = scmp.ne.s32.totalorder %s31, %s34
    %p40 = scmp.eq.s32.totalorder %s9, 0
    %p41 = por %p39, %p40
    %p42 = scmp.ne.s32.totalorder %s31, %s34
    %p43 = scmp.eq.s32.totalorder %s14, 1
    %p44 = por %p42, %p43
    %p45 = scmp.ne.s32.totalorder %s34, %s35
    %p46 = scmp.eq.s32.totalorder %s14, 0
    %p47 = por %p45, %p46
    %p48 = scmp.ne.s32.totalorder %s34, %s35
    %p49 = scmp.eq.s32.totalorder %s15, 1
    %p50 = por %p48, %p49
    %p52 = scmp.ne.s32.totalorder %s35, %s51
    %p53 = scmp.eq.s32.totalorder %s15, 0
    %p54 = por %p52, %p53
    %s56 = sadd.s32 %s55, 1
    %p59 = scmp.eq.s32.totalorder %s9, 1
    %p60 = scmp.ne.s32.totalorder %s55, %s57
    %p61 = scmp.eq.s32.totalorder %s9, 0
    %p62 = por %p60, %p61
    %p63 = scmp.ne.s32.totalorder %s55, %s57
    %p64 = scmp.eq.s32.totalorder %s14, 1
    %p65 = por %p63, %p64
    %p66 = scmp.ne.s32.totalorder %s57, %s58
    %p67 = scmp.eq.s32.totalorder %s14, 0
    %p68 = por %p66, %p67
    %p69 = scmp.ne.s32.totalorder %s57, %s58
    %p70 = scmp.eq.s32.totalorder %s15, 1
    %p71 = por %p69, %p70
    %p73 = scmp.ne.s32.totalorder %s58, %s72
    %p74 = scmp.eq.s32.totalorder %s15, 0
    %p75 = por %p73, %p74
    %s77 = sadd.s32 %s76, 1
    %p80 = scmp.eq.s32.totalorder %s9, 1
    %p81 = scmp.ne.s32.totalorder %s76, %s78
    %p82 = scmp.eq.s32.totalorder %s9, 0
    %p83 = por %p81, %p82
    %p84 = scmp.ne.s32.totalorder %s76, %s78
    %p85 = scmp.eq.s32.totalorder %s14, 1
    %p86 = por %p84, %p85
    %p87 = scmp.ne.s32.totalorder %s78, %s79
    %p88 = scmp.eq.s32.totalorder %s14, 0
    %p89 = por %p87, %p88
    %p90 = scmp.ne.s32.totalorder %s78, %s79
    %p91 = scmp.eq.s32.totalorder %s15, 1
    %p92 = por %p90, %p91
    %p94 = scmp.ne.s32.totalorder %s79, %s93
    %p95 = scmp.eq.s32.totalorder %s15, 0
    %p96 = por %p94, %p95
    %s97 = ssub.s32 %s16, %s28
    %s98 = ssub.s32 %s17, %s24
    %s99 = sor.u32 %s97, %s98
    %p100 = scmp.eq.s32.totalorder %s99, 0
    %s102 = sadd.s32 %s101, 1
    %s103 = scalar_select %p100, %s101, %s102
    %p106 = pneg %p100
    %p107 = scmp.eq.s32.totalorder %s9, 1
    %p108 = por %p106, %p107
    %p109 = scmp.ne.s32.totalorder %s101, %s104
    %p110 = scmp.eq.s32.totalorder %s9, 0
    %p111 = por %p109, %p110
    %p112 = scmp.ne.s32.totalorder %s101, %s104
    %p113 = scmp.eq.s32.totalorder %s14, 1
    %p114 = por %p112, %p113
    %p115 = scmp.ne.s32.totalorder %s104, %s105
    %p116 = scmp.eq.s32.totalorder %s14, 0
    %p117 = por %p115, %p116
    %p118 = scmp.ne.s32.totalorder %s104, %s105
    %p119 = scmp.eq.s32.totalorder %s15, 1
    %p120 = por %p118, %p119
    %p122 = scmp.ne.s32.totalorder %s105, %s121
    %p123 = scmp.eq.s32.totalorder %s15, 0
    %p124 = por %p122, %p123
    %p125 = scmp.le.s32.totalorder 1, %s9
    %p126 = scmp.lt.s32.totalorder %s9, 3
    %p127 = pnand %p125, %p126
    %p128 = pneg %p127
    // Predicated region
    $region9: #{absorbing_conv2d.1} parent=5 // pred_check
      _
    $region10: #{absorbing_conv2d.1} parent=5 // pred_check_branch
      %130 = sbr.rel (%p127) target = $region12
    $region11: #{absorbing_conv2d.1} parent=5 // pred_region
      %s131 = ssub.s32 %s9, 1
      // Predicated region
      $region13: #{absorbing_conv2d.1} parent=11 // pred_check
        %p132 = pneg %p68
      $region14: #{absorbing_conv2d.1} parent=11 // pred_check_branch
        %134 = sbr.rel (%p132) target = $region16
      $region15: #{absorbing_conv2d.1} parent=11 // pred_region
        _
      $region16: #{absorbing_conv2d.1} parent=11 // pred_fallthru
        _
      // Predicated region
      $region17: #{absorbing_conv2d.1} parent=11 // pred_check
        %p135 = pneg %p89
      $region18: #{absorbing_conv2d.1} parent=11 // pred_check_branch
        %137 = sbr.rel (%p135) target = $region20
      $region19: #{absorbing_conv2d.1} parent=11 // pred_region
        _
      $region20: #{absorbing_conv2d.1} parent=11 // pred_fallthru
        _
    $region12: #{absorbing_conv2d.1} parent=5 // pred_fallthru
      _
    %p138 = scmp.lt.s32.totalorder %s9, 2
    // Predicated region
    $region21: #{absorbing_conv2d.1} parent=5 // pred_check
      %p139 = pneg %p138
    $region22: #{absorbing_conv2d.1} parent=5 // pred_check_branch
      %141 = sbr.rel (%p139) target = $region24
    $region23: #{absorbing_conv2d.1} parent=5 // pred_region
      // Predicated region
      $region25: #{absorbing_conv2d.1} parent=23 // pred_check
        %p142 = pneg %p41
      $region26: #{absorbing_conv2d.1} parent=23 // pred_check_branch
        %144 = sbr.rel (%p142) target = $region28
      $region27: #{absorbing_conv2d.1} parent=23 // pred_region
        %p145 = scmp.lt.s32.totalorder %s16, 1
        %s146 = scalar_select %p145, %s16, 1
        %s147 = smul.addr %s146, 54
        %s148 = smul.addr %s147, 8
        %s149 = scalar_lea.vmem %s0, %s148
      $region28: #{absorbing_conv2d.1} parent=23 // pred_fallthru
        _
    $region24: #{absorbing_conv2d.1} parent=5 // pred_fallthru
      _
    %p150 = scmp.le.s32.totalorder 1, %s9
    %p151 = scmp.lt.s32.totalorder %s9, 3
    %p152 = pnand %p150, %p151
    %p153 = pneg %p152
    // Predicated region
    $region29: #{absorbing_conv2d.1} parent=5 // pred_check
      _
    $region30: #{absorbing_conv2d.1} parent=5 // pred_check_branch
      %155 = sbr.rel (%p152) target = $region32
    $region31: #{absorbing_conv2d.1} parent=5 // pred_region
      %s156 = ssub.s32 %s9, 1
      %p157 = scmp.lt.s32.totalorder %s18, 1
      %s158 = scalar_select %p157, %s18, 1
      %s159 = smul.addr %s158, 54
      %s160 = smul.addr %s159, 8
      %s161 = scalar_lea.vmem %s0, %s160
      %p162 = pneg %p47
      %p163 = pneg %p44
      %p164 = pneg %p68
      %p165 = pneg %p65
      %p166 = pneg %p89
      %p167 = pneg %p86
      %p168 = pneg %p117
      %p169 = pneg %p114
      %s170 = smul.u32 16, %s19
      %p171 = scmp.lt.s32.totalorder %s18, 1
      %s172 = scalar_select %p171, %s18, 1
      %p173 = scmp.lt.s32.totalorder %s170, 15
      %s174 = scalar_select %p173, %s170, 15
      %s175 = smul.addr %s174, 2
      %s176 = smul.addr %s172, 32
      %s177 = sadd.s32 %s175, %s176
      %s178 = smul.addr %s177, 8
      %s179 = scalar_lea.vmem %s3, %s178
      %p180 = scmp.lt.s32.totalorder %s18, 1
      %s181 = scalar_select %p180, %s18, 1
      %s182 = smul.addr %s181, 54
      %s183 = smul.addr %s182, 8
      %s184 = scalar_lea.vmem %s0, %s183
      %s185 = smul.u32 16, %s19
      %p186 = scmp.lt.s32.totalorder %s18, 1
      %s187 = scalar_select %p186, %s18, 1
      %p188 = scmp.lt.s32.totalorder %s185, 15
      %s189 = scalar_select %p188, %s185, 15
      %s190 = smul.addr %s189, 2
      %s191 = smul.addr %s187, 32
      %s192 = sadd.s32 %s190, %s191
      %s193 = smul.addr %s192, 8
      %s194 = scalar_lea.vmem %s3, %s193
      %s195 = smul.u32 16, %s19
      %s196 = smul.u32 %s19, 16
      %s197 = smul.u32 %s196, 24
      %s198 = scalar_lea.vmem %s184, %s197
      %v199 = vld [vmem:[%s198] sm:$0xff]
      %v200 = vld [vmem:[%s198 + $0x8] sm:$0xff]
      %v201 = vld [vmem:[%s198 + $0x10] sm:$0x3]
      %v202 = vld [vmem:[%s198 + $0x18] sm:$0xff]
      %v203 = vld [vmem:[%s198 + $0x20] sm:$0xff]
      %v204 = vld [vmem:[%s198 + $0x28] sm:$0x3]
      %v205 = vld [vmem:[%s198 + $0x30] sm:$0xff]
      %v206 = vld [vmem:[%s198 + $0x38] sm:$0xff]
      %v207 = vld [vmem:[%s198 + $0x40] sm:$0x3]
      %v208 = vld [vmem:[%s198 + $0x48] sm:$0xff]
      %v209 = vld [vmem:[%s198 + $0x50] sm:$0xff]
      %v210 = vld [vmem:[%s198 + $0x58] sm:$0x3]
      %v211 = vld [vmem:[%s198 + $0x60] sm:$0xff]
      %v212 = vld [vmem:[%s198 + $0x68] sm:$0xff]
      %v213 = vld [vmem:[%s198 + $0x70] sm:$0x3]
      %v214 = vld [vmem:[%s198 + $0x78] sm:$0xff]
      %v215 = vld [vmem:[%s198 + $0x80] sm:$0xff]
      %v216 = vld [vmem:[%s198 + $0x88] sm:$0x3]
      %v217 = vld [vmem:[%s198 + $0x90] sm:$0xff]
      %v218 = vld [vmem:[%s198 + $0x98] sm:$0xff]
      %v219 = vld [vmem:[%s198 + $0xa0] sm:$0x3]
      %v220 = vld [vmem:[%s198 + $0xa8] sm:$0xff]
      %v221 = vld [vmem:[%s198 + $0xb0] sm:$0xff]
      %v222 = vld [vmem:[%s198 + $0xb8] sm:$0x3]
      %v223 = vld [vmem:[%s198 + $0xc0] sm:$0xff]
      %v224 = vld [vmem:[%s198 + $0xc8] sm:$0xff]
      %v225 = vld [vmem:[%s198 + $0xd0] sm:$0x3]
      %v226 = vld [vmem:[%s198 + $0xd8] sm:$0xff]
      %v227 = vld [vmem:[%s198 + $0xe0] sm:$0xff]
      %v228 = vld [vmem:[%s198 + $0xe8] sm:$0x3]
      %v229 = vld [vmem:[%s198 + $0xf0] sm:$0xff]
      %v230 = vld [vmem:[%s198 + $0xf8] sm:$0xff]
      %v231 = vld [vmem:[%s198 + $0x100] sm:$0x3]
      %v232 = vld [vmem:[%s198 + $0x108] sm:$0xff]
      %v233 = vld [vmem:[%s198 + $0x110] sm:$0xff]
      %v234 = vld [vmem:[%s198 + $0x118] sm:$0x3]
      %v235 = vld [vmem:[%s198 + $0x120] sm:$0xff]
      %v236 = vld [vmem:[%s198 + $0x128] sm:$0xff]
      %v237 = vld [vmem:[%s198 + $0x130] sm:$0x3]
      %v238 = vld [vmem:[%s198 + $0x138] sm:$0xff]
      %v239 = vld [vmem:[%s198 + $0x140] sm:$0xff]
      %v240 = vld [vmem:[%s198 + $0x148] sm:$0x3]
      %v241 = vld [vmem:[%s198 + $0x150] sm:$0xff]
      %v242 = vld [vmem:[%s198 + $0x158] sm:$0xff]
      %v243 = vld [vmem:[%s198 + $0x160] sm:$0x3]
      %v244 = vld [vmem:[%s198 + $0x168] sm:$0xff]
      %v245 = vld [vmem:[%s198 + $0x170] sm:$0xff]
      %v246 = vld [vmem:[%s198 + $0x178] sm:$0x3]
      %v247 = vld [vmem:[%s198 + $0x180] sm:$0xff]
      %v248 = vld [vmem:[%s198 + $0x188] sm:$0xff]
      %v249 = vld [vmem:[%s198 + $0x190] sm:$0x3]
      %v250 = vld [vmem:[%s198 + $0x198] sm:$0xff]
      %v251 = vld [vmem:[%s198 + $0x1a0] sm:$0xff]
      %v252 = vld [vmem:[%s198 + $0x1a8] sm:$0x3]
      %vm253 = vcmask 31744
      %254 = vst.msk [vmem:[#allocation2] sm:$0xff] %vm253, %v199
      %255 = vst.msk [vmem:[#allocation2 + $0x8] sm:$0xff] %vm253, %v200
      %256 = vst.msk [vmem:[#allocation2 + $0x10] sm:$0xff] %vm253, %v202
      %257 = vst.msk [vmem:[#allocation2 + $0x18] sm:$0xff] %vm253, %v203
      %258 = vst.msk [vmem:[#allocation2 + $0x20] sm:$0xff] %vm253, %v205
      %259 = vst.msk [vmem:[#allocation2 + $0x28] sm:$0xff] %vm253, %v206
      %260 = vst.msk [vmem:[#allocation2 + $0x30] sm:$0xff] %vm253, %v208
      %261 = vst.msk [vmem:[#allocation2 + $0x38] sm:$0xff] %vm253, %v209
      %262 = vst.msk [vmem:[#allocation2 + $0x40] sm:$0xff] %vm253, %v211
      %263 = vst.msk [vmem:[#allocation2 + $0x48] sm:$0xff] %vm253, %v212
      %264 = vst.msk [vmem:[#allocation2 + $0x50] sm:$0xff] %vm253, %v214
      %265 = vst.msk [vmem:[#allocation2 + $0x58] sm:$0xff] %vm253, %v215
      %266 = vst.msk [vmem:[#allocation2 + $0x60] sm:$0xff] %vm253, %v217
      %267 = vst.msk [vmem:[#allocation2 + $0x68] sm:$0xff] %vm253, %v218
      %268 = vst.msk [vmem:[#allocation2 + $0x70] sm:$0xff] %vm253, %v220
      %269 = vst.msk [vmem:[#allocation2 + $0x78] sm:$0xff] %vm253, %v221
      %270 = vst.msk [vmem:[#allocation2 + $0x80] sm:$0xff] %vm253, %v223
      %271 = vst.msk [vmem:[#allocation2 + $0x88] sm:$0xff] %vm253, %v224
      %272 = vst.msk [vmem:[#allocation2 + $0x90] sm:$0xff] %vm253, %v226
      %273 = vst.msk [vmem:[#allocation2 + $0x98] sm:$0xff] %vm253, %v227
      %274 = vst.msk [vmem:[#allocation2 + $0xa0] sm:$0xff] %vm253, %v229
      %275 = vst.msk [vmem:[#allocation2 + $0xa8] sm:$0xff] %vm253, %v230
      %276 = vst.msk [vmem:[#allocation2 + $0xb0] sm:$0xff] %vm253, %v232
      %277 = vst.msk [vmem:[#allocation2 + $0xb8] sm:$0xff] %vm253, %v233
      %278 = vst.msk [vmem:[#allocation2 + $0xc0] sm:$0xff] %vm253, %v235
      %279 = vst.msk [vmem:[#allocation2 + $0xc8] sm:$0xff] %vm253, %v236
      %280 = vst.msk [vmem:[#allocation2 + $0xd0] sm:$0xff] %vm253, %v238
      %281 = vst.msk [vmem:[#allocation2 + $0xd8] sm:$0xff] %vm253, %v239
      %282 = vst.msk [vmem:[#allocation2 + $0xe0] sm:$0xff] %vm253, %v241
      %283 = vst.msk [vmem:[#allocation2 + $0xe8] sm:$0xff] %vm253, %v242
      %284 = vst.msk [vmem:[#allocation2 + $0xf0] sm:$0xff] %vm253, %v244
      %285 = vst.msk [vmem:[#allocation2 + $0xf8] sm:$0xff] %vm253, %v245
      %vm334 = vcmask 1046528
      %v335 = vrot.slane %v199, 1
      %v336 = vrot.slane %v200, 1
      %v337 = vsel %vm334, %v335, %v336
      %v338 = vrot.slane %v201, 1
      %v339 = vsel %vm334, %v336, %v338
      %v340 = vrot.slane %v202, 1
      %v341 = vrot.slane %v203, 1
      %v342 = vsel %vm334, %v340, %v341
      %v343 = vrot.slane %v204, 1
      %v344 = vsel %vm334, %v341, %v343
      %v345 = vrot.slane %v205, 1
      %v346 = vrot.slane %v206, 1
      %v347 = vsel %vm334, %v345, %v346
      %v348 = vrot.slane %v207, 1
      %v349 = vsel %vm334, %v346, %v348
      %v350 = vrot.slane %v208, 1
      %v351 = vrot.slane %v209, 1
      %v352 = vsel %vm334, %v350, %v351
      %v353 = vrot.slane %v210, 1
      %v354 = vsel %vm334, %v351, %v353
      %v355 = vrot.slane %v211, 1
      %v356 = vrot.slane %v212, 1
      %v357 = vsel %vm334, %v355, %v356
      %v358 = vrot.slane %v213, 1
      %v359 = vsel %vm334, %v356, %v358
      %v360 = vrot.slane %v214, 1
      %v361 = vrot.slane %v215, 1
      %v362 = vsel %vm334, %v360, %v361
      %v363 = vrot.slane %v216, 1
      %v364 = vsel %vm334, %v361, %v363
      %v365 = vrot.slane %v217, 1
      %v366 = vrot.slane %v218, 1
      %v367 = vsel %vm334, %v365, %v366
      %v368 = vrot.slane %v219, 1
      %v369 = vsel %vm334, %v366, %v368
      %v370 = vrot.slane %v220, 1
      %v371 = vrot.slane %v221, 1
      %v372 = vsel %vm334, %v370, %v371
      %v373 = vrot.slane %v222, 1
      %v374 = vsel %vm334, %v371, %v373
      %v375 = vrot.slane %v223, 1
      %v376 = vrot.slane %v224, 1
      %v377 = vsel %vm334, %v375, %v376
      %v378 = vrot.slane %v225, 1
      %v379 = vsel %vm334, %v376, %v378
      %v380 = vrot.slane %v226, 1
      %v381 = vrot.slane %v227, 1
      %v382 = vsel %vm334, %v380, %v381
      %v383 = vrot.slane %v228, 1
      %v384 = vsel %vm334, %v381, %v383
      %v385 = vrot.slane %v229, 1
      %v386 = vrot.slane %v230, 1
      %v387 = vsel %vm334, %v385, %v386
      %v388 = vrot.slane %v231, 1
      %v389 = vsel %vm334, %v386, %v388
      %v390 = vrot.slane %v232, 1
      %v391 = vrot.slane %v233, 1
      %v392 = vsel %vm334, %v390, %v391
      %v393 = vrot.slane %v234, 1
      %v394 = vsel %vm334, %v391, %v393
      %v395 = vrot.slane %v235, 1
      %v396 = vrot.slane %v236, 1
      %v397 = vsel %vm334, %v395, %v396
      %v398 = vrot.slane %v237, 1
      %v399 = vsel %vm334, %v396, %v398
      %v400 = vrot.slane %v238, 1
      %v401 = vrot.slane %v239, 1
      %v402 = vsel %vm334, %v400, %v401
      %v403 = vrot.slane %v240, 1
      %v404 = vsel %vm334, %v401, %v403
      %v405 = vrot.slane %v241, 1
      %v406 = vrot.slane %v242, 1
      %v407 = vsel %vm334, %v405, %v406
      %v408 = vrot.slane %v243, 1
      %v409 = vsel %vm334, %v406, %v408
      %v410 = vrot.slane %v244, 1
      %v411 = vrot.slane %v245, 1
      %v412 = vsel %vm334, %v410, %v411
      %v413 = vrot.slane %v246, 1
      %v414 = vsel %vm334, %v411, %v413
      %415 = vrot.lane.b32.xlu0 %v337, 4
      %v416 = vpop.permute.xlu0 %415
      %417 = vrot.lane.b32.xlu0 %v339, 4
      %v418 = vpop.permute.xlu0 %417
      %419 = vrot.lane.b32.xlu0 %v342, 4
      %v420 = vpop.permute.xlu0 %419
      %421 = vrot.lane.b32.xlu0 %v344, 4
      %v422 = vpop.permute.xlu0 %421
      %423 = vrot.lane.b32.xlu0 %v347, 4
      %v424 = vpop.permute.xlu0 %423
      %425 = vrot.lane.b32.xlu0 %v349, 4
      %v426 = vpop.permute.xlu0 %425
      %427 = vrot.lane.b32.xlu0 %v352, 4
      %v428 = vpop.permute.xlu0 %427
      %429 = vrot.lane.b32.xlu0 %v354, 4
      %v430 = vpop.permute.xlu0 %429
      %431 = vrot.lane.b32.xlu0 %v357, 4
      %v432 = vpop.permute.xlu0 %431
      %433 = vrot.lane.b32.xlu0 %v359, 4
      %v434 = vpop.permute.xlu0 %433
      %435 = vrot.lane.b32.xlu0 %v362, 4
      %v436 = vpop.permute.xlu0 %435
      %437 = vrot.lane.b32.xlu0 %v364, 4
      %v438 = vpop.permute.xlu0 %437
      %439 = vrot.lane.b32.xlu0 %v367, 4
      %v440 = vpop.permute.xlu0 %439
      %441 = vrot.lane.b32.xlu0 %v369, 4
      %v442 = vpop.permute.xlu0 %441
      %443 = vrot.lane.b32.xlu0 %v372, 4
      %v444 = vpop.permute.xlu0 %443
      %445 = vrot.lane.b32.xlu0 %v374, 4
      %v446 = vpop.permute.xlu0 %445
      %447 = vrot.lane.b32.xlu0 %v377, 4
      %v448 = vpop.permute.xlu0 %447
      %449 = vrot.lane.b32.xlu0 %v379, 4
      %v450 = vpop.permute.xlu0 %449
      %451 = vrot.lane.b32.xlu0 %v382, 4
      %v452 = vpop.permute.xlu0 %451
      %453 = vrot.lane.b32.xlu0 %v384, 4
      %v454 = vpop.permute.xlu0 %453
      %455 = vrot.lane.b32.xlu0 %v387, 4
      %v456 = vpop.permute.xlu0 %455
      %457 = vrot.lane.b32.xlu0 %v389, 4
      %v458 = vpop.permute.xlu0 %457
      %459 = vrot.lane.b32.xlu0 %v392, 4
      %v460 = vpop.permute.xlu0 %459
      %461 = vrot.lane.b32.xlu0 %v394, 4
      %v462 = vpop.permute.xlu0 %461
      %463 = vrot.lane.b32.xlu0 %v397, 4
      %v464 = vpop.permute.xlu0 %463
      %465 = vrot.lane.b32.xlu0 %v399, 4
      %v466 = vpop.permute.xlu0 %465
      %467 = vrot.lane.b32.xlu0 %v402, 4
      %v468 = vpop.permute.xlu0 %467
      %469 = vrot.lane.b32.xlu0 %v404, 4
      %v470 = vpop.permute.xlu0 %469
      %471 = vrot.lane.b32.xlu0 %v407, 4
      %v472 = vpop.permute.xlu0 %471
      %473 = vrot.lane.b32.xlu0 %v409, 4
      %v474 = vpop.permute.xlu0 %473
      %475 = vrot.lane.b32.xlu0 %v412, 4
      %v476 = vpop.permute.xlu0 %475
      %477 = vrot.lane.b32.xlu0 %v414, 4
      %v478 = vpop.permute.xlu0 %477
      %vm511 = vcmask 64544
      %512 = vst.msk [vmem:[#allocation2] sm:$0xff] %vm511, %v416
      %513 = vst.msk [vmem:[#allocation2 + $0x8] sm:$0xff] %vm511, %v418
      %514 = vst.msk [vmem:[#allocation2 + $0x10] sm:$0xff] %vm511, %v420
      %515 = vst.msk [vmem:[#allocation2 + $0x18] sm:$0xff] %vm511, %v422
      %516 = vst.msk [vmem:[#allocation2 + $0x20] sm:$0xff] %vm511, %v424
      %517 = vst.msk [vmem:[#allocation2 + $0x28] sm:$0xff] %vm511, %v426
      %518 = vst.msk [vmem:[#allocation2 + $0x30] sm:$0xff] %vm511, %v428
      %519 = vst.msk [vmem:[#allocation2 + $0x38] sm:$0xff] %vm511, %v430
      %520 = vst.msk [vmem:[#allocation2 + $0x40] sm:$0xff] %vm511, %v432
      %521 = vst.msk [vmem:[#allocation2 + $0x48] sm:$0xff] %vm511, %v434
      %522 = vst.msk [vmem:[#allocation2 + $0x50] sm:$0xff] %vm511, %v436
      %523 = vst.msk [vmem:[#allocation2 + $0x58] sm:$0xff] %vm511, %v438
      %524 = vst.msk [vmem:[#allocation2 + $0x60] sm:$0xff] %vm511, %v440
      %525 = vst.msk [vmem:[#allocation2 + $0x68] sm:$0xff] %vm511, %v442
      %526 = vst.msk [vmem:[#allocation2 + $0x70] sm:$0xff] %vm511, %v444
      %527 = vst.msk [vmem:[#allocation2 + $0x78] sm:$0xff] %vm511, %v446
      %528 = vst.msk [vmem:[#allocation2 + $0x80] sm:$0xff] %vm511, %v448
      %529 = vst.msk [vmem:[#allocation2 + $0x88] sm:$0xff] %vm511, %v450
      %530 = vst.msk [vmem:[#allocation2 + $0x90] sm:$0xff] %vm511, %v452
      %531 = vst.msk [vmem:[#allocation2 + $0x98] sm:$0xff] %vm511, %v454
      %532 = vst.msk [vmem:[#allocation2 + $0xa0] sm:$0xff] %vm511, %v456
      %533 = vst.msk [vmem:[#allocation2 + $0xa8] sm:$0xff] %vm511, %v458
      %534 = vst.msk [vmem:[#allocation2 + $0xb0] sm:$0xff] %vm511, %v460
      %535 = vst.msk [vmem:[#allocation2 + $0xb8] sm:$0xff] %vm511, %v462
      %536 = vst.msk [vmem:[#allocation2 + $0xc0] sm:$0xff] %vm511, %v464
      %537 = vst.msk [vmem:[#allocation2 + $0xc8] sm:$0xff] %vm511, %v466
      %538 = vst.msk [vmem:[#allocation2 + $0xd0] sm:$0xff] %vm511, %v468
      %539 = vst.msk [vmem:[#allocation2 + $0xd8] sm:$0xff] %vm511, %v470
      %540 = vst.msk [vmem:[#allocation2 + $0xe0] sm:$0xff] %vm511, %v472
      %541 = vst.msk [vmem:[#allocation2 + $0xe8] sm:$0xff] %vm511, %v474
      %542 = vst.msk [vmem:[#allocation2 + $0xf0] sm:$0xff] %vm511, %v476
      %543 = vst.msk [vmem:[#allocation2 + $0xf8] sm:$0xff] %vm511, %v478
      %vm544 = vcmask 1045504
      %v545 = vrot.slane %v199, 2
      %v546 = vrot.slane %v200, 2
      %v547 = vsel %vm544, %v545, %v546
      %v548 = vrot.slane %v201, 2
      %v549 = vsel %vm544, %v546, %v548
      %v550 = vrot.slane %v202, 2
      %v551 = vrot.slane %v203, 2
      %v552 = vsel %vm544, %v550, %v551
      %v553 = vrot.slane %v204, 2
      %v554 = vsel %vm544, %v551, %v553
      %v555 = vrot.slane %v205, 2
      %v556 = vrot.slane %v206, 2
      %v557 = vsel %vm544, %v555, %v556
      %v558 = vrot.slane %v207, 2
      %v559 = vsel %vm544, %v556, %v558
      %v560 = vrot.slane %v208, 2
      %v561 = vrot.slane %v209, 2
      %v562 = vsel %vm544, %v560, %v561
      %v563 = vrot.slane %v210, 2
      %v564 = vsel %vm544, %v561, %v563
      %v565 = vrot.slane %v211, 2
      %v566 = vrot.slane %v212, 2
      %v567 = vsel %vm544, %v565, %v566
      %v568 = vrot.slane %v213, 2
      %v569 = vsel %vm544, %v566, %v568
      %v570 = vrot.slane %v214, 2
      %v571 = vrot.slane %v215, 2
      %v572 = vsel %vm544, %v570, %v571
      %v573 = vrot.slane %v216, 2
      %v574 = vsel %vm544, %v571, %v573
      %v575 = vrot.slane %v217, 2
      %v576 = vrot.slane %v218, 2
      %v577 = vsel %vm544, %v575, %v576
      %v578 = vrot.slane %v219, 2
      %v579 = vsel %vm544, %v576, %v578
      %v580 = vrot.slane %v220, 2
      %v581 = vrot.slane %v221, 2
      %v582 = vsel %vm544, %v580, %v581
      %v583 = vrot.slane %v222, 2
      %v584 = vsel %vm544, %v581, %v583
      %v585 = vrot.slane %v223, 2
      %v586 = vrot.slane %v224, 2
      %v587 = vsel %vm544, %v585, %v586
      %v588 = vrot.slane %v225, 2
      %v589 = vsel %vm544, %v586, %v588
      %v590 = vrot.slane %v226, 2
      %v591 = vrot.slane %v227, 2
      %v592 = vsel %vm544, %v590, %v591
      %v593 = vrot.slane %v228, 2
      %v594 = vsel %vm544, %v591, %v593
      %v595 = vrot.slane %v229, 2
      %v596 = vrot.slane %v230, 2
      %v597 = vsel %vm544, %v595, %v596
      %v598 = vrot.slane %v231, 2
      %v599 = vsel %vm544, %v596, %v598
      %v600 = vrot.slane %v232, 2
      %v601 = vrot.slane %v233, 2
      %v602 = vsel %vm544, %v600, %v601
      %v603 = vrot.slane %v234, 2
      %v604 = vsel %vm544, %v601, %v603
      %v605 = vrot.slane %v235, 2
      %v606 = vrot.slane %v236, 2
      %v607 = vsel %vm544, %v605, %v606
      %v608 = vrot.slane %v237, 2
      %v609 = vsel %vm544, %v606, %v608
      %v610 = vrot.slane %v238, 2
      %v611 = vrot.slane %v239, 2
      %v612 = vsel %vm544, %v610, %v611
      %v613 = vrot.slane %v240, 2
      %v614 = vsel %vm544, %v611, %v613
      %v615 = vrot.slane %v241, 2
      %v616 = vrot.slane %v242, 2
      %v617 = vsel %vm544, %v615, %v616
      %v618 = vrot.slane %v243, 2
      %v619 = vsel %vm544, %v616, %v618
      %v620 = vrot.slane %v244, 2
      %v621 = vrot.slane %v245, 2
      %v622 = vsel %vm544, %v620, %v621
      %v623 = vrot.slane %v246, 2
      %v624 = vsel %vm544, %v621, %v623
      %625 = vrot.lane.b32.xlu0 %v547, 8
      %v626 = vpop.permute.xlu0 %625
      %627 = vrot.lane.b32.xlu0 %v549, 8
      %v628 = vpop.permute.xlu0 %627
      %629 = vrot.lane.b32.xlu0 %v552, 8
      %v630 = vpop.permute.xlu0 %629
      %631 = vrot.lane.b32.xlu0 %v554, 8
      %v632 = vpop.permute.xlu0 %631
      %633 = vrot.lane.b32.xlu0 %v557, 8
      %v634 = vpop.permute.xlu0 %633
      %635 = vrot.lane.b32.xlu0 %v559, 8
      %v636 = vpop.permute.xlu0 %635
      %637 = vrot.lane.b32.xlu0 %v562, 8
      %v638 = vpop.permute.xlu0 %637
      %639 = vrot.lane.b32.xlu0 %v564, 8
      %v640 = vpop.permute.xlu0 %639
      %641 = vrot.lane.b32.xlu0 %v567, 8
      %v642 = vpop.permute.xlu0 %641
      %643 = vrot.lane.b32.xlu0 %v569, 8
      %v644 = vpop.permute.xlu0 %643
      %645 = vrot.lane.b32.xlu0 %v572, 8
      %v646 = vpop.permute.xlu0 %645
      %647 = vrot.lane.b32.xlu0 %v574, 8
      %v648 = vpop.permute.xlu0 %647
      %649 = vrot.lane.b32.xlu0 %v577, 8
      %v650 = vpop.permute.xlu0 %649
      %651 = vrot.lane.b32.xlu0 %v579, 8
      %v652 = vpop.permute.xlu0 %651
      %653 = vrot.lane.b32.xlu0 %v582, 8
      %v654 = vpop.permute.xlu0 %653
      %655 = vrot.lane.b32.xlu0 %v584, 8
      %v656 = vpop.permute.xlu0 %655
      %657 = vrot.lane.b32.xlu0 %v587, 8
      %v658 = vpop.permute.xlu0 %657
      %659 = vrot.lane.b32.xlu0 %v589, 8
      %v660 = vpop.permute.xlu0 %659
      %661 = vrot.lane.b32.xlu0 %v592, 8
      %v662 = vpop.permute.xlu0 %661
      %663 = vrot.lane.b32.xlu0 %v594, 8
      %v664 = vpop.permute.xlu0 %663
      %665 = vrot.lane.b32.xlu0 %v597, 8
      %v666 = vpop.permute.xlu0 %665
      %667 = vrot.lane.b32.xlu0 %v599, 8
      %v668 = vpop.permute.xlu0 %667
      %669 = vrot.lane.b32.xlu0 %v602, 8
      %v670 = vpop.permute.xlu0 %669
      %671 = vrot.lane.b32.xlu0 %v604, 8
      %v672 = vpop.permute.xlu0 %671
      %673 = vrot.lane.b32.xlu0 %v607, 8
      %v674 = vpop.permute.xlu0 %673
      %675 = vrot.lane.b32.xlu0 %v609, 8
      %v676 = vpop.permute.xlu0 %675
      %677 = vrot.lane.b32.xlu0 %v612, 8
      %v678 = vpop.permute.xlu0 %677
      %679 = vrot.lane.b32.xlu0 %v614, 8
      %v680 = vpop.permute.xlu0 %679
      %681 = vrot.lane.b32.xlu0 %v617, 8
      %v682 = vpop.permute.xlu0 %681
      %683 = vrot.lane.b32.xlu0 %v619, 8
      %v684 = vpop.permute.xlu0 %683
      %685 = vrot.lane.b32.xlu0 %v622, 8
      %v686 = vpop.permute.xlu0 %685
      %687 = vrot.lane.b32.xlu0 %v624, 8
      %v688 = vpop.permute.xlu0 %687
      %vm721 = vcmask 97344
      %722 = vst.msk [vmem:[#allocation2] sm:$0xff] %vm721, %v626
      %723 = vst.msk [vmem:[#allocation2 + $0x8] sm:$0xff] %vm721, %v628
      %724 = vst.msk [vmem:[#allocation2 + $0x10] sm:$0xff] %vm721, %v630
      %725 = vst.msk [vmem:[#allocation2 + $0x18] sm:$0xff] %vm721, %v632
      %726 = vst.msk [vmem:[#allocation2 + $0x20] sm:$0xff] %vm721, %v634
      %727 = vst.msk [vmem:[#allocation2 + $0x28] sm:$0xff] %vm721, %v636
      %728 = vst.msk [vmem:[#allocation2 + $0x30] sm:$0xff] %vm721, %v638
      %729 = vst.msk [vmem:[#allocation2 + $0x38] sm:$0xff] %vm721, %v640
      %730 = vst.msk [vmem:[#allocation2 + $0x40] sm:$0xff] %vm721, %v642
      %731 = vst.msk [vmem:[#allocation2 + $0x48] sm:$0xff] %vm721, %v644
      %732 = vst.msk [vmem:[#allocation2 + $0x50] sm:$0xff] %vm721, %v646
      %733 = vst.msk [vmem:[#allocation2 + $0x58] sm:$0xff] %vm721, %v648
      %734 = vst.msk [vmem:[#allocation2 + $0x60] sm:$0xff] %vm721, %v650
      %735 = vst.msk [vmem:[#allocation2 + $0x68] sm:$0xff] %vm721, %v652
      %736 = vst.msk [vmem:[#allocation2 + $0x70] sm:$0xff] %vm721, %v654
      %737 = vst.msk [vmem:[#allocation2 + $0x78] sm:$0xff] %vm721, %v656
      %738 = vst.msk [vmem:[#allocation2 + $0x80] sm:$0xff] %vm721, %v658
      %739 = vst.msk [vmem:[#allocation2 + $0x88] sm:$0xff] %vm721, %v660
      %740 = vst.msk [vmem:[#allocation2 + $0x90] sm:$0xff] %vm721, %v662
      %741 = vst.msk [vmem:[#allocation2 + $0x98] sm:$0xff] %vm721, %v664
      %742 = vst.msk [vmem:[#allocation2 + $0xa0] sm:$0xff] %vm721, %v666
      %743 = vst.msk [vmem:[#allocation2 + $0xa8] sm:$0xff] %vm721, %v668
      %744 = vst.msk [vmem:[#allocation2 + $0xb0] sm:$0xff] %vm721, %v670
      %745 = vst.msk [vmem:[#allocation2 + $0xb8] sm:$0xff] %vm721, %v672
      %746 = vst.msk [vmem:[#allocation2 + $0xc0] sm:$0xff] %vm721, %v674
      %747 = vst.msk [vmem:[#allocation2 + $0xc8] sm:$0xff] %vm721, %v676
      %748 = vst.msk [vmem:[#allocation2 + $0xd0] sm:$0xff] %vm721, %v678
      %749 = vst.msk [vmem:[#allocation2 + $0xd8] sm:$0xff] %vm721, %v680
      %750 = vst.msk [vmem:[#allocation2 + $0xe0] sm:$0xff] %vm721, %v682
      %751 = vst.msk [vmem:[#allocation2 + $0xe8] sm:$0xff] %vm721, %v684
      %752 = vst.msk [vmem:[#allocation2 + $0xf0] sm:$0xff] %vm721, %v686
      %753 = vst.msk [vmem:[#allocation2 + $0xf8] sm:$0xff] %vm721, %v688
      %756 = vrot.lane.b32.xlu0 %v202, 12
      %v757 = vpop.permute.xlu0 %756
      %758 = vrot.lane.b32.xlu0 %v203, 12
      %v759 = vpop.permute.xlu0 %758
      %760 = vrot.lane.b32.xlu0 %v205, 12
      %v761 = vpop.permute.xlu0 %760
      %762 = vrot.lane.b32.xlu0 %v206, 12
      %v763 = vpop.permute.xlu0 %762
      %764 = vrot.lane.b32.xlu0 %v208, 12
      %v765 = vpop.permute.xlu0 %764
      %766 = vrot.lane.b32.xlu0 %v209, 12
      %v767 = vpop.permute.xlu0 %766
      %768 = vrot.lane.b32.xlu0 %v211, 12
      %v769 = vpop.permute.xlu0 %768
      %770 = vrot.lane.b32.xlu0 %v212, 12
      %v771 = vpop.permute.xlu0 %770
      %772 = vrot.lane.b32.xlu0 %v214, 12
      %v773 = vpop.permute.xlu0 %772
      %774 = vrot.lane.b32.xlu0 %v215, 12
      %v775 = vpop.permute.xlu0 %774
      %776 = vrot.lane.b32.xlu0 %v217, 12
      %v777 = vpop.permute.xlu0 %776
      %778 = vrot.lane.b32.xlu0 %v218, 12
      %v779 = vpop.permute.xlu0 %778
      %780 = vrot.lane.b32.xlu0 %v220, 12
      %v781 = vpop.permute.xlu0 %780
      %782 = vrot.lane.b32.xlu0 %v221, 12
      %v783 = vpop.permute.xlu0 %782
      %784 = vrot.lane.b32.xlu0 %v223, 12
      %v785 = vpop.permute.xlu0 %784
      %786 = vrot.lane.b32.xlu0 %v224, 12
      %v787 = vpop.permute.xlu0 %786
      %788 = vrot.lane.b32.xlu0 %v226, 12
      %v789 = vpop.permute.xlu0 %788
      %790 = vrot.lane.b32.xlu0 %v227, 12
      %v791 = vpop.permute.xlu0 %790
      %792 = vrot.lane.b32.xlu0 %v229, 12
      %v793 = vpop.permute.xlu0 %792
      %794 = vrot.lane.b32.xlu0 %v230, 12
      %v795 = vpop.permute.xlu0 %794
      %796 = vrot.lane.b32.xlu0 %v232, 12
      %v797 = vpop.permute.xlu0 %796
      %798 = vrot.lane.b32.xlu0 %v233, 12
      %v799 = vpop.permute.xlu0 %798
      %800 = vrot.lane.b32.xlu0 %v235, 12
      %v801 = vpop.permute.xlu0 %800
      %802 = vrot.lane.b32.xlu0 %v236, 12
      %v803 = vpop.permute.xlu0 %802
      %804 = vrot.lane.b32.xlu0 %v238, 12
      %v805 = vpop.permute.xlu0 %804
      %806 = vrot.lane.b32.xlu0 %v239, 12
      %v807 = vpop.permute.xlu0 %806
      %808 = vrot.lane.b32.xlu0 %v241, 12
      %v809 = vpop.permute.xlu0 %808
      %810 = vrot.lane.b32.xlu0 %v242, 12
      %v811 = vpop.permute.xlu0 %810
      %812 = vrot.lane.b32.xlu0 %v244, 12
      %v813 = vpop.permute.xlu0 %812
      %814 = vrot.lane.b32.xlu0 %v245, 12
      %v815 = vpop.permute.xlu0 %814
      %816 = vrot.lane.b32.xlu0 %v247, 12
      %v817 = vpop.permute.xlu0 %816
      %818 = vrot.lane.b32.xlu0 %v248, 12
      %v819 = vpop.permute.xlu0 %818
      %vm852 = vcmask 130144
      %853 = vst.msk [vmem:[#allocation2] sm:$0xff] %vm852, %v757
      %854 = vst.msk [vmem:[#allocation2 + $0x8] sm:$0xff] %vm852, %v759
      %855 = vst.msk [vmem:[#allocation2 + $0x10] sm:$0xff] %vm852, %v761
      %856 = vst.msk [vmem:[#allocation2 + $0x18] sm:$0xff] %vm852, %v763
      %857 = vst.msk [vmem:[#allocation2 + $0x20] sm:$0xff] %vm852, %v765
      %858 = vst.msk [vmem:[#allocation2 + $0x28] sm:$0xff] %vm852, %v767
      %859 = vst.msk [vmem:[#allocation2 + $0x30] sm:$0xff] %vm852, %v769
      %860 = vst.msk [vmem:[#allocation2 + $0x38] sm:$0xff] %vm852, %v771
      %861 = vst.msk [vmem:[#allocation2 + $0x40] sm:$0xff] %vm852, %v773
      %862 = vst.msk [vmem:[#allocation2 + $0x48] sm:$0xff] %vm852, %v775
      %863 = vst.msk [vmem:[#allocation2 + $0x50] sm:$0xff] %vm852, %v777
      %864 = vst.msk [vmem:[#allocation2 + $0x58] sm:$0xff] %vm852, %v779
      %865 = vst.msk [vmem:[#allocation2 + $0x60] sm:$0xff] %vm852, %v781
      %866 = vst.msk [vmem:[#allocation2 + $0x68] sm:$0xff] %vm852, %v783
      %867 = vst.msk [vmem:[#allocation2 + $0x70] sm:$0xff] %vm852, %v785
      %868 = vst.msk [vmem:[#allocation2 + $0x78] sm:$0xff] %vm852, %v787
      %869 = vst.msk [vmem:[#allocation2 + $0x80] sm:$0xff] %vm852, %v789
      %870 = vst.msk [vmem:[#allocation2 + $0x88] sm:$0xff] %vm852, %v791
      %871 = vst.msk [vmem:[#allocation2 + $0x90] sm:$0xff] %vm852, %v793
      %872 = vst.msk [vmem:[#allocation2 + $0x98] sm:$0xff] %vm852, %v795
      %873 = vst.msk [vmem:[#allocation2 + $0xa0] sm:$0xff] %vm852, %v797
      %874 = vst.msk [vmem:[#allocation2 + $0xa8] sm:$0xff] %vm852, %v799
      %875 = vst.msk [vmem:[#allocation2 + $0xb0] sm:$0xff] %vm852, %v801
      %876 = vst.msk [vmem:[#allocation2 + $0xb8] sm:$0xff] %vm852, %v803
      %877 = vst.msk [vmem:[#allocation2 + $0xc0] sm:$0xff] %vm852, %v805
      %878 = vst.msk [vmem:[#allocation2 + $0xc8] sm:$0xff] %vm852, %v807
      %879 = vst.msk [vmem:[#allocation2 + $0xd0] sm:$0xff] %vm852, %v809
      %880 = vst.msk [vmem:[#allocation2 + $0xd8] sm:$0xff] %vm852, %v811
      %881 = vst.msk [vmem:[#allocation2 + $0xe0] sm:$0xff] %vm852, %v813
      %882 = vst.msk [vmem:[#allocation2 + $0xe8] sm:$0xff] %vm852, %v815
      %883 = vst.msk [vmem:[#allocation2 + $0xf0] sm:$0xff] %vm852, %v817
      %884 = vst.msk [vmem:[#allocation2 + $0xf8] sm:$0xff] %vm852, %v819
      %v886 = vrot.slane %v247, 1
      %v887 = vrot.slane %v248, 1
      %v888 = vsel %vm334, %v886, %v887
      %v889 = vrot.slane %v249, 1
      %v890 = vsel %vm334, %v887, %v889
      %891 = vrot.lane.b32.xlu0 %v342, 16
      %v892 = vpop.permute.xlu0 %891
      %893 = vrot.lane.b32.xlu0 %v344, 16
      %v894 = vpop.permute.xlu0 %893
      %895 = vrot.lane.b32.xlu0 %v347, 16
      %v896 = vpop.permute.xlu0 %895
      %897 = vrot.lane.b32.xlu0 %v349, 16
      %v898 = vpop.permute.xlu0 %897
      %899 = vrot.lane.b32.xlu0 %v352, 16
      %v900 = vpop.permute.xlu0 %899
      %901 = vrot.lane.b32.xlu0 %v354, 16
      %v902 = vpop.permute.xlu0 %901
      %903 = vrot.lane.b32.xlu0 %v357, 16
      %v904 = vpop.permute.xlu0 %903
      %905 = vrot.lane.b32.xlu0 %v359, 16
      %v906 = vpop.permute.xlu0 %905
      %907 = vrot.lane.b32.xlu0 %v362, 16
      %v908 = vpop.permute.xlu0 %907
      %909 = vrot.lane.b32.xlu0 %v364, 16
      %v910 = vpop.permute.xlu0 %909
      %911 = vrot.lane.b32.xlu0 %v367, 16
      %v912 = vpop.permute.xlu0 %911
      %913 = vrot.lane.b32.xlu0 %v369, 16
      %v914 = vpop.permute.xlu0 %913
      %915 = vrot.lane.b32.xlu0 %v372, 16
      %v916 = vpop.permute.xlu0 %915
      %917 = vrot.lane.b32.xlu0 %v374, 16
      %v918 = vpop.permute.xlu0 %917
      %919 = vrot.lane.b32.xlu0 %v377, 16
      %v920 = vpop.permute.xlu0 %919
      %921 = vrot.lane.b32.xlu0 %v379, 16
      %v922 = vpop.permute.xlu0 %921
      %923 = vrot.lane.b32.xlu0 %v382, 16
      %v924 = vpop.permute.xlu0 %923
      %925 = vrot.lane.b32.xlu0 %v384, 16
      %v926 = vpop.permute.xlu0 %925
      %927 = vrot.lane.b32.xlu0 %v387, 16
      %v928 = vpop.permute.xlu0 %927
      %929 = vrot.lane.b32.xlu0 %v389, 16
      %v930 = vpop.permute.xlu0 %929
      %931 = vrot.lane.b32.xlu0 %v392, 16
      %v932 = vpop.permute.xlu0 %931
      %933 = vrot.lane.b32.xlu0 %v394, 16
      %v934 = vpop.permute.xlu0 %933
      %935 = vrot.lane.b32.xlu0 %v397, 16
      %v936 = vpop.permute.xlu0 %935
      %937 = vrot.lane.b32.xlu0 %v399, 16
      %v938 = vpop.permute.xlu0 %937
      %939 = vrot.lane.b32.xlu0 %v402, 16
      %v940 = vpop.permute.xlu0 %939
      %941 = vrot.lane.b32.xlu0 %v404, 16
      %v942 = vpop.permute.xlu0 %941
      %943 = vrot.lane.b32.xlu0 %v407, 16
      %v944 = vpop.permute.xlu0 %943
      %945 = vrot.lane.b32.xlu0 %v409, 16
      %v946 = vpop.permute.xlu0 %945
      %947 = vrot.lane.b32.xlu0 %v412, 16
      %v948 = vpop.permute.xlu0 %947
      %949 = vrot.lane.b32.xlu0 %v414, 16
      %v950 = vpop.permute.xlu0 %949
      %951 = vrot.lane.b32.xlu0 %v888, 16
      %v952 = vpop.permute.xlu0 %951
      %953 = vrot.lane.b32.xlu0 %v890, 16
      %v954 = vpop.permute.xlu0 %953
      %vm987 = vcmask 162944
      %988 = vst.msk [vmem:[#allocation2] sm:$0xff] %vm987, %v892
      %989 = vst.msk [vmem:[#allocation2 + $0x8] sm:$0xff] %vm987, %v894
      %990 = vst.msk [vmem:[#allocation2 + $0x10] sm:$0xff] %vm987, %v896
      %991 = vst.msk [vmem:[#allocation2 + $0x18] sm:$0xff] %vm987, %v898
      %992 = vst.msk [vmem:[#allocation2 + $0x20] sm:$0xff] %vm987, %v900
      %993 = vst.msk [vmem:[#allocation2 + $0x28] sm:$0xff] %vm987, %v902
      %994 = vst.msk [vmem:[#allocation2 + $0x30] sm:$0xff] %vm987, %v904
      %995 = vst.msk [vmem:[#allocation2 + $0x38] sm:$0xff] %vm987, %v906
      %996 = vst.msk [vmem:[#allocation2 + $0x40] sm:$0xff] %vm987, %v908
      %997 = vst.msk [vmem:[#allocation2 + $0x48] sm:$0xff] %vm987, %v910
      %998 = vst.msk [vmem:[#allocation2 + $0x50] sm:$0xff] %vm987, %v912
      %999 = vst.msk [vmem:[#allocation2 + $0x58] sm:$0xff] %vm987, %v914
      %1000 = vst.msk [vmem:[#allocation2 + $0x60] sm:$0xff] %vm987, %v916
      %1001 = vst.msk [vmem:[#allocation2 + $0x68] sm:$0xff] %vm987, %v918
      %1002 = vst.msk [vmem:[#allocation2 + $0x70] sm:$0xff] %vm987, %v920
      %1003 = vst.msk [vmem:[#allocation2 + $0x78] sm:$0xff] %vm987, %v922
      %1004 = vst.msk [vmem:[#allocation2 + $0x80] sm:$0xff] %vm987, %v924
      %1005 = vst.msk [vmem:[#allocation2 + $0x88] sm:$0xff] %vm987, %v926
      %1006 = vst.msk [vmem:[#allocation2 + $0x90] sm:$0xff] %vm987, %v928
      %1007 = vst.msk [vmem:[#allocation2 + $0x98] sm:$0xff] %vm987, %v930
      %1008 = vst.msk [vmem:[#allocation2 + $0xa0] sm:$0xff] %vm987, %v932
      %1009 = vst.msk [vmem:[#allocation2 + $0xa8] sm:$0xff] %vm987, %v934
      %1010 = vst.msk [vmem:[#allocation2 + $0xb0] sm:$0xff] %vm987, %v936
      %1011 = vst.msk [vmem:[#allocation2 + $0xb8] sm:$0xff] %vm987, %v938
      %1012 = vst.msk [vmem:[#allocation2 + $0xc0] sm:$0xff] %vm987, %v940
      %1013 = vst.msk [vmem:[#allocation2 + $0xc8] sm:$0xff] %vm987, %v942
      %1014 = vst.msk [vmem:[#allocation2 + $0xd0] sm:$0xff] %vm987, %v944
      %1015 = vst.msk [vmem:[#allocation2 + $0xd8] sm:$0xff] %vm987, %v946
      %1016 = vst.msk [vmem:[#allocation2 + $0xe0] sm:$0xff] %vm987, %v948
      %1017 = vst.msk [vmem:[#allocation2 + $0xe8] sm:$0xff] %vm987, %v950
      %1018 = vst.msk [vmem:[#allocation2 + $0xf0] sm:$0xff] %vm987, %v952
      %1019 = vst.msk [vmem:[#allocation2 + $0xf8] sm:$0xff] %vm987, %v954
      %v1020 = vrot.slane %v247, 2
      %v1021 = vrot.slane %v248, 2
      %v1022 = vsel %vm544, %v1020, %v1021
      %v1023 = vrot.slane %v249, 2
      %v1024 = vsel %vm544, %v1021, %v1023
      %1025 = vrot.lane.b32.xlu0 %v552, 20
      %v1026 = vpop.permute.xlu0 %1025
      %1027 = vrot.lane.b32.xlu0 %v554, 20
      %v1028 = vpop.permute.xlu0 %1027
      %1029 = vrot.lane.b32.xlu0 %v557, 20
      %v1030 = vpop.permute.xlu0 %1029
      %1031 = vrot.lane.b32.xlu0 %v559, 20
      %v1032 = vpop.permute.xlu0 %1031
      %1033 = vrot.lane.b32.xlu0 %v562, 20
      %v1034 = vpop.permute.xlu0 %1033
      %1035 = vrot.lane.b32.xlu0 %v564, 20
      %v1036 = vpop.permute.xlu0 %1035
      %1037 = vrot.lane.b32.xlu0 %v567, 20
      %v1038 = vpop.permute.xlu0 %1037
      %1039 = vrot.lane.b32.xlu0 %v569, 20
      %v1040 = vpop.permute.xlu0 %1039
      %1041 = vrot.lane.b32.xlu0 %v572, 20
      %v1042 = vpop.permute.xlu0 %1041
      %1043 = vrot.lane.b32.xlu0 %v574, 20
      %v1044 = vpop.permute.xlu0 %1043
      %1045 = vrot.lane.b32.xlu0 %v577, 20
      %v1046 = vpop.permute.xlu0 %1045
      %1047 = vrot.lane.b32.xlu0 %v579, 20
      %v1048 = vpop.permute.xlu0 %1047
      %1049 = vrot.lane.b32.xlu0 %v582, 20
      %v1050 = vpop.permute.xlu0 %1049
      %1051 = vrot.lane.b32.xlu0 %v584, 20
      %v1052 = vpop.permute.xlu0 %1051
      %1053 = vrot.lane.b32.xlu0 %v587, 20
      %v1054 = vpop.permute.xlu0 %1053
      %1055 = vrot.lane.b32.xlu0 %v589, 20
      %v1056 = vpop.permute.xlu0 %1055
      %1057 = vrot.lane.b32.xlu0 %v592, 20
      %v1058 = vpop.permute.xlu0 %1057
      %1059 = vrot.lane.b32.xlu0 %v594, 20
      %v1060 = vpop.permute.xlu0 %1059
      %1061 = vrot.lane.b32.xlu0 %v597, 20
      %v1062 = vpop.permute.xlu0 %1061
      %1063 = vrot.lane.b32.xlu0 %v599, 20
      %v1064 = vpop.permute.xlu0 %1063
      %1065 = vrot.lane.b32.xlu0 %v602, 20
      %v1066 = vpop.permute.xlu0 %1065
      %1067 = vrot.lane.b32.xlu0 %v604, 20
      %v1068 = vpop.permute.xlu0 %1067
      %1069 = vrot.lane.b32.xlu0 %v607, 20
      %v1070 = vpop.permute.xlu0 %1069
      %1071 = vrot.lane.b32.xlu0 %v609, 20
      %v1072 = vpop.permute.xlu0 %1071
      %1073 = vrot.lane.b32.xlu0 %v612, 20
      %v1074 = vpop.permute.xlu0 %1073
      %1075 = vrot.lane.b32.xlu0 %v614, 20
      %v1076 = vpop.permute.xlu0 %1075
      %1077 = vrot.lane.b32.xlu0 %v617, 20
      %v1078 = vpop.permute.xlu0 %1077
      %1079 = vrot.lane.b32.xlu0 %v619, 20
      %v1080 = vpop.permute.xlu0 %1079
      %1081 = vrot.lane.b32.xlu0 %v622, 20
      %v1082 = vpop.permute.xlu0 %1081
      %1083 = vrot.lane.b32.xlu0 %v624, 20
      %v1084 = vpop.permute.xlu0 %1083
      %1085 = vrot.lane.b32.xlu0 %v1022, 20
      %v1086 = vpop.permute.xlu0 %1085
      %1087 = vrot.lane.b32.xlu0 %v1024, 20
      %v1088 = vpop.permute.xlu0 %1087
      %vm1121 = vcmask 195744
      %1122 = vst.msk [vmem:[#allocation2] sm:$0xff] %vm1121, %v1026
      %1123 = vst.msk [vmem:[#allocation2 + $0x8] sm:$0xff] %vm1121, %v1028
      %1124 = vst.msk [vmem:[#allocation2 + $0x10] sm:$0xff] %vm1121, %v1030
      %1125 = vst.msk [vmem:[#allocation2 + $0x18] sm:$0xff] %vm1121, %v1032
      %1126 = vst.msk [vmem:[#allocation2 + $0x20] sm:$0xff] %vm1121, %v1034
      %1127 = vst.msk [vmem:[#allocation2 + $0x28] sm:$0xff] %vm1121, %v1036
      %1128 = vst.msk [vmem:[#allocation2 + $0x30] sm:$0xff] %vm1121, %v1038
      %1129 = vst.msk [vmem:[#allocation2 + $0x38] sm:$0xff] %vm1121, %v1040
      %1130 = vst.msk [vmem:[#allocation2 + $0x40] sm:$0xff] %vm1121, %v1042
      %1131 = vst.msk [vmem:[#allocation2 + $0x48] sm:$0xff] %vm1121, %v1044
      %1132 = vst.msk [vmem:[#allocation2 + $0x50] sm:$0xff] %vm1121, %v1046
      %1133 = vst.msk [vmem:[#allocation2 + $0x58] sm:$0xff] %vm1121, %v1048
      %1134 = vst.msk [vmem:[#allocation2 + $0x60] sm:$0xff] %vm1121, %v1050
      %1135 = vst.msk [vmem:[#allocation2 + $0x68] sm:$0xff] %vm1121, %v1052
      %1136 = vst.msk [vmem:[#allocation2 + $0x70] sm:$0xff] %vm1121, %v1054
      %1137 = vst.msk [vmem:[#allocation2 + $0x78] sm:$0xff] %vm1121, %v1056
      %1138 = vst.msk [vmem:[#allocation2 + $0x80] sm:$0xff] %vm1121, %v1058
      %1139 = vst.msk [vmem:[#allocation2 + $0x88] sm:$0xff] %vm1121, %v1060
      %1140 = vst.msk [vmem:[#allocation2 + $0x90] sm:$0xff] %vm1121, %v1062
      %1141 = vst.msk [vmem:[#allocation2 + $0x98] sm:$0xff] %vm1121, %v1064
      %1142 = vst.msk [vmem:[#allocation2 + $0xa0] sm:$0xff] %vm1121, %v1066
      %1143 = vst.msk [vmem:[#allocation2 + $0xa8] sm:$0xff] %vm1121, %v1068
      %1144 = vst.msk [vmem:[#allocation2 + $0xb0] sm:$0xff] %vm1121, %v1070
      %1145 = vst.msk [vmem:[#allocation2 + $0xb8] sm:$0xff] %vm1121, %v1072
      %1146 = vst.msk [vmem:[#allocation2 + $0xc0] sm:$0xff] %vm1121, %v1074
      %1147 = vst.msk [vmem:[#allocation2 + $0xc8] sm:$0xff] %vm1121, %v1076
      %1148 = vst.msk [vmem:[#allocation2 + $0xd0] sm:$0xff] %vm1121, %v1078
      %1149 = vst.msk [vmem:[#allocation2 + $0xd8] sm:$0xff] %vm1121, %v1080
      %1150 = vst.msk [vmem:[#allocation2 + $0xe0] sm:$0xff] %vm1121, %v1082
      %1151 = vst.msk [vmem:[#allocation2 + $0xe8] sm:$0xff] %vm1121, %v1084
      %1152 = vst.msk [vmem:[#allocation2 + $0xf0] sm:$0xff] %vm1121, %v1086
      %1153 = vst.msk [vmem:[#allocation2 + $0xf8] sm:$0xff] %vm1121, %v1088
      %1156 = vrot.lane.b32.xlu0 %v205, 24
      %v1157 = vpop.permute.xlu0 %1156
      %1158 = vrot.lane.b32.xlu0 %v206, 24
      %v1159 = vpop.permute.xlu0 %1158
      %1160 = vrot.lane.b32.xlu0 %v208, 24
      %v1161 = vpop.permute.xlu0 %1160
      %1162 = vrot.lane.b32.xlu0 %v209, 24
      %v1163 = vpop.permute.xlu0 %1162
      %1164 = vrot.lane.b32.xlu0 %v211, 24
      %v1165 = vpop.permute.xlu0 %1164
      %1166 = vrot.lane.b32.xlu0 %v212, 24
      %v1167 = vpop.permute.xlu0 %1166
      %1168 = vrot.lane.b32.xlu0 %v214, 24
      %v1169 = vpop.permute.xlu0 %1168
      %1170 = vrot.lane.b32.xlu0 %v215, 24
      %v1171 = vpop.permute.xlu0 %1170
      %1172 = vrot.lane.b32.xlu0 %v217, 24
      %v1173 = vpop.permute.xlu0 %1172
      %1174 = vrot.lane.b32.xlu0 %v218, 24
      %v1175 = vpop.permute.xlu0 %1174
      %1176 = vrot.lane.b32.xlu0 %v220, 24
      %v1177 = vpop.permute.xlu0 %1176
      %1178 = vrot.lane.b32.xlu0 %v221, 24
      %v1179 = vpop.permute.xlu0 %1178
      %1180 = vrot.lane.b32.xlu0 %v223, 24
      %v1181 = vpop.permute.xlu0 %1180
      %1182 = vrot.lane.b32.xlu0 %v224, 24
      %v1183 = vpop.permute.xlu0 %1182
      %1184 = vrot.lane.b32.xlu0 %v226, 24
      %v1185 = vpop.permute.xlu0 %1184
      %1186 = vrot.lane.b32.xlu0 %v227, 24
      %v1187 = vpop.permute.xlu0 %1186
      %1188 = vrot.lane.b32.xlu0 %v229, 24
      %v1189 = vpop.permute.xlu0 %1188
      %1190 = vrot.lane.b32.xlu0 %v230, 24
      %v1191 = vpop.permute.xlu0 %1190
      %1192 = vrot.lane.b32.xlu0 %v232, 24
      %v1193 = vpop.permute.xlu0 %1192
      %1194 = vrot.lane.b32.xlu0 %v233, 24
      %v1195 = vpop.permute.xlu0 %1194
      %1196 = vrot.lane.b32.xlu0 %v235, 24
      %v1197 = vpop.permute.xlu0 %1196
      %1198 = vrot.lane.b32.xlu0 %v236, 24
      %v1199 = vpop.permute.xlu0 %1198
      %1200 = vrot.lane.b32.xlu0 %v238, 24
      %v1201 = vpop.permute.xlu0 %1200
      %1202 = vrot.lane.b32.xlu0 %v239, 24
      %v1203 = vpop.permute.xlu0 %1202
      %1204 = vrot.lane.b32.xlu0 %v241, 24
      %v1205 = vpop.permute.xlu0 %1204
      %1206 = vrot.lane.b32.xlu0 %v242, 24
      %v1207 = vpop.permute.xlu0 %1206
      %1208 = vrot.lane.b32.xlu0 %v244, 24
      %v1209 = vpop.permute.xlu0 %1208
      %1210 = vrot.lane.b32.xlu0 %v245, 24
      %v1211 = vpop.permute.xlu0 %1210
      %1212 = vrot.lane.b32.xlu0 %v247, 24
      %v1213 = vpop.permute.xlu0 %1212
      %1214 = vrot.lane.b32.xlu0 %v248, 24
      %v1215 = vpop.permute.xlu0 %1214
      %1216 = vrot.lane.b32.xlu0 %v250, 24
      %v1217 = vpop.permute.xlu0 %1216
      %1218 = vrot.lane.b32.xlu0 %v251, 24
      %v1219 = vpop.permute.xlu0 %1218
      %vm1252 = vcmask 228544
      %1253 = vst.msk [vmem:[#allocation2] sm:$0xff] %vm1252, %v1157
      %1254 = vst.msk [vmem:[#allocation2 + $0x8] sm:$0xff] %vm1252, %v1159
      %1255 = vst.msk [vmem:[#allocation2 + $0x10] sm:$0xff] %vm1252, %v1161
      %1256 = vst.msk [vmem:[#allocation2 + $0x18] sm:$0xff] %vm1252, %v1163
      %1257 = vst.msk [vmem:[#allocation2 + $0x20] sm:$0xff] %vm1252, %v1165
      %1258 = vst.msk [vmem:[#allocation2 + $0x28] sm:$0xff] %vm1252, %v1167
      %1259 = vst.msk [vmem:[#allocation2 + $0x30] sm:$0xff] %vm1252, %v1169
      %1260 = vst.msk [vmem:[#allocation2 + $0x38] sm:$0xff] %vm1252, %v1171
      %1261 = vst.msk [vmem:[#allocation2 + $0x40] sm:$0xff] %vm1252, %v1173
      %1262 = vst.msk [vmem:[#allocation2 + $0x48] sm:$0xff] %vm1252, %v1175
      %1263 = vst.msk [vmem:[#allocation2 + $0x50] sm:$0xff] %vm1252, %v1177
      %1264 = vst.msk [vmem:[#allocation2 + $0x58] sm:$0xff] %vm1252, %v1179
      %1265 = vst.msk [vmem:[#allocation2 + $0x60] sm:$0xff] %vm1252, %v1181
      %1266 = vst.msk [vmem:[#allocation2 + $0x68] sm:$0xff] %vm1252, %v1183
      %1267 = vst.msk [vmem:[#allocation2 + $0x70] sm:$0xff] %vm1252, %v1185
      %1268 = vst.msk [vmem:[#allocation2 + $0x78] sm:$0xff] %vm1252, %v1187
      %1269 = vst.msk [vmem:[#allocation2 + $0x80] sm:$0xff] %vm1252, %v1189
      %1270 = vst.msk [vmem:[#allocation2 + $0x88] sm:$0xff] %vm1252, %v1191
      %1271 = vst.msk [vmem:[#allocation2 + $0x90] sm:$0xff] %vm1252, %v1193
      %1272 = vst.msk [vmem:[#allocation2 + $0x98] sm:$0xff] %vm1252, %v1195
      %1273 = vst.msk [vmem:[#allocation2 + $0xa0] sm:$0xff] %vm1252, %v1197
      %1274 = vst.msk [vmem:[#allocation2 + $0xa8] sm:$0xff] %vm1252, %v1199
      %1275 = vst.msk [vmem:[#allocation2 + $0xb0] sm:$0xff] %vm1252, %v1201
      %1276 = vst.msk [vmem:[#allocation2 + $0xb8] sm:$0xff] %vm1252, %v1203
      %1277 = vst.msk [vmem:[#allocation2 + $0xc0] sm:$0xff] %vm1252, %v1205
      %1278 = vst.msk [vmem:[#allocation2 + $0xc8] sm:$0xff] %vm1252, %v1207
      %1279 = vst.msk [vmem:[#allocation2 + $0xd0] sm:$0xff] %vm1252, %v1209
      %1280 = vst.msk [vmem:[#allocation2 + $0xd8] sm:$0xff] %vm1252, %v1211
      %1281 = vst.msk [vmem:[#allocation2 + $0xe0] sm:$0xff] %vm1252, %v1213
      %1282 = vst.msk [vmem:[#allocation2 + $0xe8] sm:$0xff] %vm1252, %v1215
      %1283 = vst.msk [vmem:[#allocation2 + $0xf0] sm:$0xff] %vm1252, %v1217
      %1284 = vst.msk [vmem:[#allocation2 + $0xf8] sm:$0xff] %vm1252, %v1219
      %v1286 = vrot.slane %v250, 1
      %v1287 = vrot.slane %v251, 1
      %v1288 = vsel %vm334, %v1286, %v1287
      %v1289 = vrot.slane %v252, 1
      %v1290 = vsel %vm334, %v1287, %v1289
      %1291 = vrot.lane.b32.xlu0 %v347, 28
      %v1292 = vpop.permute.xlu0 %1291
      %1293 = vrot.lane.b32.xlu0 %v349, 28
      %v1294 = vpop.permute.xlu0 %1293
      %1295 = vrot.lane.b32.xlu0 %v352, 28
      %v1296 = vpop.permute.xlu0 %1295
      %1297 = vrot.lane.b32.xlu0 %v354, 28
      %v1298 = vpop.permute.xlu0 %1297
      %1299 = vrot.lane.b32.xlu0 %v357, 28
      %v1300 = vpop.permute.xlu0 %1299
      %1301 = vrot.lane.b32.xlu0 %v359, 28
      %v1302 = vpop.permute.xlu0 %1301
      %1303 = vrot.lane.b32.xlu0 %v362, 28
      %v1304 = vpop.permute.xlu0 %1303
      %1305 = vrot.lane.b32.xlu0 %v364, 28
      %v1306 = vpop.permute.xlu0 %1305
      %1307 = vrot.lane.b32.xlu0 %v367, 28
      %v1308 = vpop.permute.xlu0 %1307
      %1309 = vrot.lane.b32.xlu0 %v369, 28
      %v1310 = vpop.permute.xlu0 %1309
      %1311 = vrot.lane.b32.xlu0 %v372, 28
      %v1312 = vpop.permute.xlu0 %1311
      %1313 = vrot.lane.b32.xlu0 %v374, 28
      %v1314 = vpop.permute.xlu0 %1313
      %1315 = vrot.lane.b32.xlu0 %v377, 28
      %v1316 = vpop.permute.xlu0 %1315
      %1317 = vrot.lane.b32.xlu0 %v379, 28
      %v1318 = vpop.permute.xlu0 %1317
      %1319 = vrot.lane.b32.xlu0 %v382, 28
      %v1320 = vpop.permute.xlu0 %1319
      %1321 = vrot.lane.b32.xlu0 %v384, 28
      %v1322 = vpop.permute.xlu0 %1321
      %1323 = vrot.lane.b32.xlu0 %v387, 28
      %v1324 = vpop.permute.xlu0 %1323
      %1325 = vrot.lane.b32.xlu0 %v389, 28
      %v1326 = vpop.permute.xlu0 %1325
      %1327 = vrot.lane.b32.xlu0 %v392, 28
      %v1328 = vpop.permute.xlu0 %1327
      %1329 = vrot.lane.b32.xlu0 %v394, 28
      %v1330 = vpop.permute.xlu0 %1329
      %1331 = vrot.lane.b32.xlu0 %v397, 28
      %v1332 = vpop.permute.xlu0 %1331
      %1333 = vrot.lane.b32.xlu0 %v399, 28
      %v1334 = vpop.permute.xlu0 %1333
      %1335 = vrot.lane.b32.xlu0 %v402, 28
      %v1336 = vpop.permute.xlu0 %1335
      %1337 = vrot.lane.b32.xlu0 %v404, 28
      %v1338 = vpop.permute.xlu0 %1337
      %1339 = vrot.lane.b32.xlu0 %v407, 28
      %v1340 = vpop.permute.xlu0 %1339
      %1341 = vrot.lane.b32.xlu0 %v409, 28
      %v1342 = vpop.permute.xlu0 %1341
      %1343 = vrot.lane.b32.xlu0 %v412, 28
      %v1344 = vpop.permute.xlu0 %1343
      %1345 = vrot.lane.b32.xlu0 %v414, 28
      %v1346 = vpop.permute.xlu0 %1345
      %1347 = vrot.lane.b32.xlu0 %v888, 28
      %v1348 = vpop.permute.xlu0 %1347
      %1349 = vrot.lane.b32.xlu0 %v890, 28
      %v1350 = vpop.permute.xlu0 %1349
      %1351 = vrot.lane.b32.xlu0 %v1288, 28
      %v1352 = vpop.permute.xlu0 %1351
      %1353 = vrot.lane.b32.xlu0 %v1290, 28
      %v1354 = vpop.permute.xlu0 %1353
      %vm1387 = vcmask 261344
      %1388 = vst.msk [vmem:[#allocation2] sm:$0xff] %vm1387, %v1292
      %1389 = vst.msk [vmem:[#allocation2 + $0x8] sm:$0xff] %vm1387, %v1294
      %1390 = vst.msk [vmem:[#allocation2 + $0x10] sm:$0xff] %vm1387, %v1296
      %1391 = vst.msk [vmem:[#allocation2 + $0x18] sm:$0xff] %vm1387, %v1298
      %1392 = vst.msk [vmem:[#allocation2 + $0x20] sm:$0xff] %vm1387, %v1300
      %1393 = vst.msk [vmem:[#allocation2 + $0x28] sm:$0xff] %vm1387, %v1302
      %1394 = vst.msk [vmem:[#allocation2 + $0x30] sm:$0xff] %vm1387, %v1304
      %1395 = vst.msk [vmem:[#allocation2 + $0x38] sm:$0xff] %vm1387, %v1306
      %1396 = vst.msk [vmem:[#allocation2 + $0x40] sm:$0xff] %vm1387, %v1308
      %1397 = vst.msk [vmem:[#allocation2 + $0x48] sm:$0xff] %vm1387, %v1310
      %1398 = vst.msk [vmem:[#allocation2 + $0x50] sm:$0xff] %vm1387, %v1312
      %1399 = vst.msk [vmem:[#allocation2 + $0x58] sm:$0xff] %vm1387, %v1314
      %1400 = vst.msk [vmem:[#allocation2 + $0x60] sm:$0xff] %vm1387, %v1316
      %1401 = vst.msk [vmem:[#allocation2 + $0x68] sm:$0xff] %vm1387, %v1318
      %1402 = vst.msk [vmem:[#allocation2 + $0x70] sm:$0xff] %vm1387, %v1320
      %1403 = vst.msk [vmem:[#allocation2 + $0x78] sm:$0xff] %vm1387, %v1322
      %1404 = vst.msk [vmem:[#allocation2 + $0x80] sm:$0xff] %vm1387, %v1324
      %1405 = vst.msk [vmem:[#allocation2 + $0x88] sm:$0xff] %vm1387, %v1326
      %1406 = vst.msk [vmem:[#allocation2 + $0x90] sm:$0xff] %vm1387, %v1328
      %1407 = vst.msk [vmem:[#allocation2 + $0x98] sm:$0xff] %vm1387, %v1330
      %1408 = vst.msk [vmem:[#allocation2 + $0xa0] sm:$0xff] %vm1387, %v1332
      %1409 = vst.msk [vmem:[#allocation2 + $0xa8] sm:$0xff] %vm1387, %v1334
      %1410 = vst.msk [vmem:[#allocation2 + $0xb0] sm:$0xff] %vm1387, %v1336
      %1411 = vst.msk [vmem:[#allocation2 + $0xb8] sm:$0xff] %vm1387, %v1338
      %1412 = vst.msk [vmem:[#allocation2 + $0xc0] sm:$0xff] %vm1387, %v1340
      %1413 = vst.msk [vmem:[#allocation2 + $0xc8] sm:$0xff] %vm1387, %v1342
      %1414 = vst.msk [vmem:[#allocation2 + $0xd0] sm:$0xff] %vm1387, %v1344
      %1415 = vst.msk [vmem:[#allocation2 + $0xd8] sm:$0xff] %vm1387, %v1346
      %1416 = vst.msk [vmem:[#allocation2 + $0xe0] sm:$0xff] %vm1387, %v1348
      %1417 = vst.msk [vmem:[#allocation2 + $0xe8] sm:$0xff] %vm1387, %v1350
      %1418 = vst.msk [vmem:[#allocation2 + $0xf0] sm:$0xff] %vm1387, %v1352
      %1419 = vst.msk [vmem:[#allocation2 + $0xf8] sm:$0xff] %vm1387, %v1354
      %v1420 = vrot.slane %v250, 2
      %v1421 = vrot.slane %v251, 2
      %v1422 = vsel %vm544, %v1420, %v1421
      %v1423 = vrot.slane %v252, 2
      %v1424 = vsel %vm544, %v1421, %v1423
      %1425 = vrot.lane.b32.xlu0 %v557, 32
      %v1426 = vpop.permute.xlu0 %1425
      %1427 = vrot.lane.b32.xlu0 %v559, 32
      %v1428 = vpop.permute.xlu0 %1427
      %1429 = vrot.lane.b32.xlu0 %v562, 32
      %v1430 = vpop.permute.xlu0 %1429
      %1431 = vrot.lane.b32.xlu0 %v564, 32
      %v1432 = vpop.permute.xlu0 %1431
      %1433 = vrot.lane.b32.xlu0 %v567, 32
      %v1434 = vpop.permute.xlu0 %1433
      %1435 = vrot.lane.b32.xlu0 %v569, 32
      %v1436 = vpop.permute.xlu0 %1435
      %1437 = vrot.lane.b32.xlu0 %v572, 32
      %v1438 = vpop.permute.xlu0 %1437
      %1439 = vrot.lane.b32.xlu0 %v574, 32
      %v1440 = vpop.permute.xlu0 %1439
      %1441 = vrot.lane.b32.xlu0 %v577, 32
      %v1442 = vpop.permute.xlu0 %1441
      %1443 = vrot.lane.b32.xlu0 %v579, 32
      %v1444 = vpop.permute.xlu0 %1443
      %1445 = vrot.lane.b32.xlu0 %v582, 32
      %v1446 = vpop.permute.xlu0 %1445
      %1447 = vrot.lane.b32.xlu0 %v584, 32
      %v1448 = vpop.permute.xlu0 %1447
      %1449 = vrot.lane.b32.xlu0 %v587, 32
      %v1450 = vpop.permute.xlu0 %1449
      %1451 = vrot.lane.b32.xlu0 %v589, 32
      %v1452 = vpop.permute.xlu0 %1451
      %1453 = vrot.lane.b32.xlu0 %v592, 32
      %v1454 = vpop.permute.xlu0 %1453
      %1455 = vrot.lane.b32.xlu0 %v594, 32
      %v1456 = vpop.permute.xlu0 %1455
      %1457 = vrot.lane.b32.xlu0 %v597, 32
      %v1458 = vpop.permute.xlu0 %1457
      %1459 = vrot.lane.b32.xlu0 %v599, 32
      %v1460 = vpop.permute.xlu0 %1459
      %1461 = vrot.lane.b32.xlu0 %v602, 32
      %v1462 = vpop.permute.xlu0 %1461
      %1463 = vrot.lane.b32.xlu0 %v604, 32
      %v1464 = vpop.permute.xlu0 %1463
      %1465 = vrot.lane.b32.xlu0 %v607, 32
      %v1466 = vpop.permute.xlu0 %1465
      %1467 = vrot.lane.b32.xlu0 %v609, 32
      %v1468 = vpop.permute.xlu0 %1467
      %1469 = vrot.lane.b32.xlu0 %v612, 32
      %v1470 = vpop.permute.xlu0 %1469
      %1471 = vrot.lane.b32.xlu0 %v614, 32
      %v1472 = vpop.permute.xlu0 %1471
      %1473 = vrot.lane.b32.xlu0 %v617, 32
      %v1474 = vpop.permute.xlu0 %1473
      %1475 = vrot.lane.b32.xlu0 %v619, 32
      %v1476 = vpop.permute.xlu0 %1475
      %1477 = vrot.lane.b32.xlu0 %v622, 32
      %v1478 = vpop.permute.xlu0 %1477
      %1479 = vrot.lane.b32.xlu0 %v624, 32
      %v1480 = vpop.permute.xlu0 %1479
      %1481 = vrot.lane.b32.xlu0 %v1022, 32
      %v1482 = vpop.permute.xlu0 %1481
      %1483 = vrot.lane.b32.xlu0 %v1024, 32
      %v1484 = vpop.permute.xlu0 %1483
      %1485 = vrot.lane.b32.xlu0 %v1422, 32
      %v1486 = vpop.permute.xlu0 %1485
      %1487 = vrot.lane.b32.xlu0 %v1424, 32
      %v1488 = vpop.permute.xlu0 %1487
      %vm1521 = vcmask 294144
      %1522 = vst.msk [vmem:[#allocation2] sm:$0xff] %vm1521, %v1426
      %1523 = vst.msk [vmem:[#allocation2 + $0x8] sm:$0xff] %vm1521, %v1428
      %1524 = vst.msk [vmem:[#allocation2 + $0x10] sm:$0xff] %vm1521, %v1430
      %1525 = vst.msk [vmem:[#allocation2 + $0x18] sm:$0xff] %vm1521, %v1432
      %1526 = vst.msk [vmem:[#allocation2 + $0x20] sm:$0xff] %vm1521, %v1434
      %1527 = vst.msk [vmem:[#allocation2 + $0x28] sm:$0xff] %vm1521, %v1436
      %1528 = vst.msk [vmem:[#allocation2 + $0x30] sm:$0xff] %vm1521, %v1438
      %1529 = vst.msk [vmem:[#allocation2 + $0x38] sm:$0xff] %vm1521, %v1440
      %1530 = vst.msk [vmem:[#allocation2 + $0x40] sm:$0xff] %vm1521, %v1442
      %1531 = vst.msk [vmem:[#allocation2 + $0x48] sm:$0xff] %vm1521, %v1444
      %1532 = vst.msk [vmem:[#allocation2 + $0x50] sm:$0xff] %vm1521, %v1446
      %1533 = vst.msk [vmem:[#allocation2 + $0x58] sm:$0xff] %vm1521, %v1448
      %1534 = vst.msk [vmem:[#allocation2 + $0x60] sm:$0xff] %vm1521, %v1450
      %1535 = vst.msk [vmem:[#allocation2 + $0x68] sm:$0xff] %vm1521, %v1452
      %1536 = vst.msk [vmem:[#allocation2 + $0x70] sm:$0xff] %vm1521, %v1454
      %1537 = vst.msk [vmem:[#allocation2 + $0x78] sm:$0xff] %vm1521, %v1456
      %1538 = vst.msk [vmem:[#allocation2 + $0x80] sm:$0xff] %vm1521, %v1458
      %1539 = vst.msk [vmem:[#allocation2 + $0x88] sm:$0xff] %vm1521, %v1460
      %1540 = vst.msk [vmem:[#allocation2 + $0x90] sm:$0xff] %vm1521, %v1462
      %1541 = vst.msk [vmem:[#allocation2 + $0x98] sm:$0xff] %vm1521, %v1464
      %1542 = vst.msk [vmem:[#allocation2 + $0xa0] sm:$0xff] %vm1521, %v1466
      %1543 = vst.msk [vmem:[#allocation2 + $0xa8] sm:$0xff] %vm1521, %v1468
      %1544 = vst.msk [vmem:[#allocation2 + $0xb0] sm:$0xff] %vm1521, %v1470
      %1545 = vst.msk [vmem:[#allocation2 + $0xb8] sm:$0xff] %vm1521, %v1472
      %1546 = vst.msk [vmem:[#allocation2 + $0xc0] sm:$0xff] %vm1521, %v1474
      %1547 = vst.msk [vmem:[#allocation2 + $0xc8] sm:$0xff] %vm1521, %v1476
      %1548 = vst.msk [vmem:[#allocation2 + $0xd0] sm:$0xff] %vm1521, %v1478
      %1549 = vst.msk [vmem:[#allocation2 + $0xd8] sm:$0xff] %vm1521, %v1480
      %1550 = vst.msk [vmem:[#allocation2 + $0xe0] sm:$0xff] %vm1521, %v1482
      %1551 = vst.msk [vmem:[#allocation2 + $0xe8] sm:$0xff] %vm1521, %v1484
      %1552 = vst.msk [vmem:[#allocation2 + $0xf0] sm:$0xff] %vm1521, %v1486
      %1553 = vst.msk [vmem:[#allocation2 + $0xf8] sm:$0xff] %vm1521, %v1488
      %v1554 = vld [vmem:[#allocation2] sm:$0xff]
      %v1555 = vld [vmem:[#allocation2 + $0x8] sm:$0xff]
      %v1556 = vld [vmem:[#allocation2 + $0x10] sm:$0xff]
      %v1557 = vld [vmem:[#allocation2 + $0x18] sm:$0xff]
      %v1558 = vld [vmem:[#allocation2 + $0x20] sm:$0xff]
      %v1559 = vld [vmem:[#allocation2 + $0x28] sm:$0xff]
      %v1560 = vld [vmem:[#allocation2 + $0x30] sm:$0xff]
      %v1561 = vld [vmem:[#allocation2 + $0x38] sm:$0xff]
      %v1562 = vld [vmem:[#allocation2 + $0x40] sm:$0xff]
      %v1563 = vld [vmem:[#allocation2 + $0x48] sm:$0xff]
      %v1564 = vld [vmem:[#allocation2 + $0x50] sm:$0xff]
      %v1565 = vld [vmem:[#allocation2 + $0x58] sm:$0xff]
      %v1566 = vld [vmem:[#allocation2 + $0x60] sm:$0xff]
      %v1567 = vld [vmem:[#allocation2 + $0x68] sm:$0xff]
      %v1568 = vld [vmem:[#allocation2 + $0x70] sm:$0xff]
      %v1569 = vld [vmem:[#allocation2 + $0x78] sm:$0xff]
      %v1570 = vld [vmem:[#allocation2 + $0x80] sm:$0xff]
      %v1571 = vld [vmem:[#allocation2 + $0x88] sm:$0xff]
      %v1572 = vld [vmem:[#allocation2 + $0x90] sm:$0xff]
      %v1573 = vld [vmem:[#allocation2 + $0x98] sm:$0xff]
      %v1574 = vld [vmem:[#allocation2 + $0xa0] sm:$0xff]
      %v1575 = vld [vmem:[#allocation2 + $0xa8] sm:$0xff]
      %v1576 = vld [vmem:[#allocation2 + $0xb0] sm:$0xff]
      %v1577 = vld [vmem:[#allocation2 + $0xb8] sm:$0xff]
      %v1578 = vld [vmem:[#allocation2 + $0xc0] sm:$0xff]
      %v1579 = vld [vmem:[#allocation2 + $0xc8] sm:$0xff]
      %v1580 = vld [vmem:[#allocation2 + $0xd0] sm:$0xff]
      %v1581 = vld [vmem:[#allocation2 + $0xd8] sm:$0xff]
      %v1582 = vld [vmem:[#allocation2 + $0xe0] sm:$0xff]
      %v1583 = vld [vmem:[#allocation2 + $0xe8] sm:$0xff]
      %v1584 = vld [vmem:[#allocation2 + $0xf0] sm:$0xff]
      %v1585 = vld [vmem:[#allocation2 + $0xf8] sm:$0xff]
      %v1586 = vld [vmem:[%s1] sm:$0xff]
      %v1587 = vld [vmem:[%s1 + $0x8] sm:$0xff]
      %v1588 = vld [vmem:[%s1 + $0x10] sm:$0xff]
      %v1589 = vld [vmem:[%s1 + $0x18] sm:$0xff]
      %v1590 = vld [vmem:[%s1 + $0x20] sm:$0xf]
      %v1591 = vld [vmem:[%s2] sm:$0x1]
      %v1593 = vlaneseq
      %v1594 = vshrl.u32 %v1593, 7
      %v1595 = vsub.s32 0, %v1594
      %v1596 = vrot.slane %v1591, %v1595
      %vm1598 = vcmask 293888
      %v1600 = vsel %vm1598, %v1554, 0
      %v1603 = vsel %vm1598, %v1555, 0
      %v1606 = vsel %vm1598, %v1556, 0
      %v1609 = vsel %vm1598, %v1557, 0
      %v1612 = vsel %vm1598, %v1558, 0
      %v1615 = vsel %vm1598, %v1559, 0
      %v1618 = vsel %vm1598, %v1560, 0
      %v1621 = vsel %vm1598, %v1561, 0
      %v1624 = vsel %vm1598, %v1562, 0
      %v1627 = vsel %vm1598, %v1563, 0
      %v1630 = vsel %vm1598, %v1564, 0
      %v1633 = vsel %vm1598, %v1565, 0
      %v1636 = vsel %vm1598, %v1566, 0
      %v1639 = vsel %vm1598, %v1567, 0
      %v1642 = vsel %vm1598, %v1568, 0
      %v1645 = vsel %vm1598, %v1569, 0
      %v1648 = vsel %vm1598, %v1570, 0
      %v1651 = vsel %vm1598, %v1571, 0
      %v1654 = vsel %vm1598, %v1572, 0
      %v1657 = vsel %vm1598, %v1573, 0
      %v1660 = vsel %vm1598, %v1574, 0
      %v1663 = vsel %vm1598, %v1575, 0
      %v1666 = vsel %vm1598, %v1576, 0
      %v1669 = vsel %vm1598, %v1577, 0
      %v1672 = vsel %vm1598, %v1578, 0
      %v1675 = vsel %vm1598, %v1579, 0
      %v1678 = vsel %vm1598, %v1580, 0
      %v1681 = vsel %vm1598, %v1581, 0
      %v1684 = vsel %vm1598, %v1582, 0
      %v1687 = vsel %vm1598, %v1583, 0
      %v1690 = vsel %vm1598, %v1584, 0
      %v1693 = vsel %vm1598, %v1585, 0
      %vm1695 = vcmask 1043456
      %v1697 = vsel %vm1695, %v1590, 0
      %1699 = vmatprep.subr.mxu0 0.0
      %1700 = vmatpush1.msra.mxu0 %v1586
      %1701 = vmatprep.subr.mxu0 0.0
      %1702 = vmatpush1.msra.mxu0 %v1587
      %1703 = vmatprep.subr.mxu0 0.0
      %1704 = vmatpush1.msra.mxu0 %v1588
      %1705 = vmatprep.subr.mxu0 0.0
      %1706 = vmatpush1.msra.mxu0 %v1589
      %1707 = vmatprep.subr.mxu0 0.0
      %1708 = vmatpush1.msra.mxu0 %v1697
      %1709 = vmatprep.subr.mxu0 0.0
      %1710 = vmatpush1.msra.mxu0 0.0
      %1711 = vmatprep.subr.mxu0 0.0
      %1712 = vmatpush1.msra.mxu0 0.0
      %1713 = vmatprep.subr.mxu0 0.0
      %1714 = vmatpush1.msra.mxu0 0.0
      %1715 = vmatprep.subr.mxu0 0.0
      %1716 = vmatpush1.msra.mxu0 0.0
      %1717 = vmatprep.subr.mxu0 0.0
      %1718 = vmatpush1.msra.mxu0 0.0
      %1719 = vmatprep.subr.mxu0 0.0
      %1720 = vmatpush1.msra.mxu0 0.0
      %1721 = vmatprep.subr.mxu0 0.0
      %1722 = vmatpush1.msra.mxu0 0.0
      %1723 = vmatprep.subr.mxu0 0.0
      %1724 = vmatpush1.msra.mxu0 0.0
      %1725 = vmatprep.subr.mxu0 0.0
      %1726 = vmatpush1.msra.mxu0 0.0
      %1727 = vmatprep.subr.mxu0 0.0
      %1728 = vmatpush1.msra.mxu0 0.0
      %1729 = vmatprep.subr.mxu0 0.0
      %1730 = vmatpush1.msra.mxu0 0.0
      %1731 = vmatprep.subr.mxu0 0.0
      %1732 = vmatpush1.msra.mxu0 0.0
      %1733 = vmatprep.subr.mxu0 0.0
      %1734 = vmatpush1.msra.mxu0 0.0
      %1735 = vmatprep.subr.mxu0 0.0
      %1736 = vmatpush1.msra.mxu0 0.0
      %1737 = vmatprep.subr.mxu0 0.0
      %1738 = vmatpush1.msra.mxu0 0.0
      %1739 = vmatprep.subr.mxu0 0.0
      %1740 = vmatpush1.msra.mxu0 0.0
      %1741 = vmatprep.subr.mxu0 0.0
      %1742 = vmatpush1.msra.mxu0 0.0
      %1743 = vmatprep.subr.mxu0 0.0
      %1744 = vmatpush1.msra.mxu0 0.0
      %1745 = vmatprep.subr.mxu0 0.0
      %1746 = vmatpush1.msra.mxu0 0.0
      %1747 = vmatprep.subr.mxu0 0.0
      %1748 = vmatpush1.msra.mxu0 0.0
      %1749 = vmatprep.subr.mxu0 0.0
      %1750 = vmatpush1.msra.mxu0 0.0
      %1751 = vmatprep.subr.mxu0 0.0
      %1752 = vmatpush1.msra.mxu0 0.0
      %1753 = vmatprep.subr.mxu0 0.0
      %1754 = vmatpush1.msra.mxu0 0.0
      %1755 = vmatprep.subr.mxu0 0.0
      %1756 = vmatpush1.msra.mxu0 0.0
      %1757 = vmatprep.subr.mxu0 0.0
      %1758 = vmatpush1.msra.mxu0 0.0
      %1759 = vmatprep.subr.mxu0 0.0
      %1760 = vmatpush1.msra.mxu0 0.0
      %1761 = vmatprep.subr.mxu0 0.0
      %1762 = vmatpush1.msra.mxu0 0.0
      %1763 = vmatprep.mubr.f32.mxu0 0.0
      %1764 = vmatmul.mubr.f32.gmra.mrb[0].mxu0 %v1600
      %v1765 = vpop.f32.mrb[0].mxu0
      %v1766 = vadd.f32 %v1596, %v1765
      %v1767 = vpop.f32.mrb[0].mxu0
      %1768 = vmatprep.mubr.f32.mxu0 0.0
      %1769 = vmatmul.mubr.f32.gmra.mrb[0].mxu0 %v1603
      %v1770 = vpop.f32.mrb[0].mxu0
      %v1771 = vadd.f32 %v1596, %v1770
      %v1772 = vpop.f32.mrb[0].mxu0
      %1773 = vmatprep.mubr.f32.mxu0 0.0
      %1774 = vmatmul.mubr.f32.gmra.mrb[0].mxu0 %v1606
      %v1775 = vpop.f32.mrb[0].mxu0
      %v1776 = vadd.f32 %v1596, %v1775
      %v1777 = vpop.f32.mrb[0].mxu0
      %1778 = vmatprep.mubr.f32.mxu0 0.0
      %1779 = vmatmul.mubr.f32.gmra.mrb[0].mxu0 %v1609
      %v1780 = vpop.f32.mrb[0].mxu0
      %v1781 = vadd.f32 %v1596, %v1780
      %v1782 = vpop.f32.mrb[0].mxu0
      %1783 = vmatprep.mubr.f32.mxu0 0.0
      %1784 = vmatmul.mubr.f32.gmra.mrb[0].mxu0 %v1612
      %v1785 = vpop.f32.mrb[0].mxu0
      %v1786 = vadd.f32 %v1596, %v1785
      %v1787 = vpop.f32.mrb[0].mxu0
      %1788 = vmatprep.mubr.f32.mxu0 0.0
      %1789 = vmatmul.mubr.f32.gmra.mrb[0].mxu0 %v1615
      %v1790 = vpop.f32.mrb[0].mxu0
      %v1791 = vadd.f32 %v1596, %v1790
      %v1792 = vpop.f32.mrb[0].mxu0
      %1793 = vmatprep.mubr.f32.mxu0 0.0
      %1794 = vmatmul.mubr.f32.gmra.mrb[0].mxu0 %v1618
      %v1795 = vpop.f32.mrb[0].mxu0
      %v1796 = vadd.f32 %v1596, %v1795
      %v1797 = vpop.f32.mrb[0].mxu0
      %1798 = vmatprep.mubr.f32.mxu0 0.0
      %1799 = vmatmul.mubr.f32.gmra.mrb[0].mxu0 %v1621
      %v1800 = vpop.f32.mrb[0].mxu0
      %v1801 = vadd.f32 %v1596, %v1800
      %v1802 = vpop.f32.mrb[0].mxu0
      %1803 = vmatprep.mubr.f32.mxu0 0.0
      %1804 = vmatmul.mubr.f32.gmra.mrb[0].mxu0 %v1624
      %v1805 = vpop.f32.mrb[0].mxu0
      %v1806 = vadd.f32 %v1596, %v1805
      %v1807 = vpop.f32.mrb[0].mxu0
      %1808 = vmatprep.mubr.f32.mxu0 0.0
      %1809 = vmatmul.mubr.f32.gmra.mrb[0].mxu0 %v1627
      %v1810 = vpop.f32.mrb[0].mxu0
      %v1811 = vadd.f32 %v1596, %v1810
      %v1812 = vpop.f32.mrb[0].mxu0
      %1813 = vmatprep.mubr.f32.mxu0 0.0
      %1814 = vmatmul.mubr.f32.gmra.mrb[0].mxu0 %v1630
      %v1815 = vpop.f32.mrb[0].mxu0
      %v1816 = vadd.f32 %v1596, %v1815
      %v1817 = vpop.f32.mrb[0].mxu0
      %1818 = vmatprep.mubr.f32.mxu0 0.0
      %1819 = vmatmul.mubr.f32.gmra.mrb[0].mxu0 %v1633
      %v1820 = vpop.f32.mrb[0].mxu0
      %v1821 = vadd.f32 %v1596, %v1820
      %v1822 = vpop.f32.mrb[0].mxu0
      %1823 = vmatprep.mubr.f32.mxu0 0.0
      %1824 = vmatmul.mubr.f32.gmra.mrb[0].mxu0 %v1636
      %v1825 = vpop.f32.mrb[0].mxu0
      %v1826 = vadd.f32 %v1596, %v1825
      %v1827 = vpop.f32.mrb[0].mxu0
      %1828 = vmatprep.mubr.f32.mxu0 0.0
      %1829 = vmatmul.mubr.f32.gmra.mrb[0].mxu0 %v1639
      %v1830 = vpop.f32.mrb[0].mxu0
      %v1831 = vadd.f32 %v1596, %v1830
      %v1832 = vpop.f32.mrb[0].mxu0
      %1833 = vmatprep.mubr.f32.mxu0 0.0
      %1834 = vmatmul.mubr.f32.gmra.mrb[0].mxu0 %v1642
      %v1835 = vpop.f32.mrb[0].mxu0
      %v1836 = vadd.f32 %v1596, %v1835
      %v1837 = vpop.f32.mrb[0].mxu0
      %1838 = vmatprep.mubr.f32.mxu0 0.0
      %1839 = vmatmul.mubr.f32.gmra.mrb[0].mxu0 %v1645
      %v1840 = vpop.f32.mrb[0].mxu0
      %v1841 = vadd.f32 %v1596, %v1840
      %v1842 = vpop.f32.mrb[0].mxu0
      %1843 = vmatprep.mubr.f32.mxu0 0.0
      %1844 = vmatmul.mubr.f32.gmra.mrb[0].mxu0 %v1648
      %v1845 = vpop.f32.mrb[0].mxu0
      %v1846 = vadd.f32 %v1596, %v1845
      %v1847 = vpop.f32.mrb[0].mxu0
      %1848 = vmatprep.mubr.f32.mxu0 0.0
      %1849 = vmatmul.mubr.f32.gmra.mrb[0].mxu0 %v1651
      %v1850 = vpop.f32.mrb[0].mxu0
      %v1851 = vadd.f32 %v1596, %v1850
      %v1852 = vpop.f32.mrb[0].mxu0
      %1853 = vmatprep.mubr.f32.mxu0 0.0
      %1854 = vmatmul.mubr.f32.gmra.mrb[0].mxu0 %v1654
      %v1855 = vpop.f32.mrb[0].mxu0
      %v1856 = vadd.f32 %v1596, %v1855
      %v1857 = vpop.f32.mrb[0].mxu0
      %1858 = vmatprep.mubr.f32.mxu0 0.0
      %1859 = vmatmul.mubr.f32.gmra.mrb[0].mxu0 %v1657
      %v1860 = vpop.f32.mrb[0].mxu0
      %v1861 = vadd.f32 %v1596, %v1860
      %v1862 = vpop.f32.mrb[0].mxu0
      %1863 = vmatprep.mubr.f32.mxu0 0.0
      %1864 = vmatmul.mubr.f32.gmra.mrb[0].mxu0 %v1660
      %v1865 = vpop.f32.mrb[0].mxu0
      %v1866 = vadd.f32 %v1596, %v1865
      %v1867 = vpop.f32.mrb[0].mxu0
      %1868 = vmatprep.mubr.f32.mxu0 0.0
      %1869 = vmatmul.mubr.f32.gmra.mrb[0].mxu0 %v1663
      %v1870 = vpop.f32.mrb[0].mxu0
      %v1871 = vadd.f32 %v1596, %v1870
      %v1872 = vpop.f32.mrb[0].mxu0
      %1873 = vmatprep.mubr.f32.mxu0 0.0
      %1874 = vmatmul.mubr.f32.gmra.mrb[0].mxu0 %v1666
      %v1875 = vpop.f32.mrb[0].mxu0
      %v1876 = vadd.f32 %v1596, %v1875
      %v1877 = vpop.f32.mrb[0].mxu0
      %1878 = vmatprep.mubr.f32.mxu0 0.0
      %1879 = vmatmul.mubr.f32.gmra.mrb[0].mxu0 %v1669
      %v1880 = vpop.f32.mrb[0].mxu0
      %v1881 = vadd.f32 %v1596, %v1880
      %v1882 = vpop.f32.mrb[0].mxu0
      %1883 = vmatprep.mubr.f32.mxu0 0.0
      %1884 = vmatmul.mubr.f32.gmra.mrb[0].mxu0 %v1672
      %v1885 = vpop.f32.mrb[0].mxu0
      %v1886 = vadd.f32 %v1596, %v1885
      %v1887 = vpop.f32.mrb[0].mxu0
      %1888 = vmatprep.mubr.f32.mxu0 0.0
      %1889 = vmatmul.mubr.f32.gmra.mrb[0].mxu0 %v1675
      %v1890 = vpop.f32.mrb[0].mxu0
      %v1891 = vadd.f32 %v1596, %v1890
      %v1892 = vpop.f32.mrb[0].mxu0
      %1893 = vmatprep.mubr.f32.mxu0 0.0
      %1894 = vmatmul.mubr.f32.gmra.mrb[0].mxu0 %v1678
      %v1895 = vpop.f32.mrb[0].mxu0
      %v1896 = vadd.f32 %v1596, %v1895
      %v1897 = vpop.f32.mrb[0].mxu0
      %1898 = vmatprep.mubr.f32.mxu0 0.0
      %1899 = vmatmul.mubr.f32.gmra.mrb[0].mxu0 %v1681
      %v1900 = vpop.f32.mrb[0].mxu0
      %v1901 = vadd.f32 %v1596, %v1900
      %v1902 = vpop.f32.mrb[0].mxu0
      %1903 = vmatprep.mubr.f32.mxu0 0.0
      %1904 = vmatmul.mubr.f32.gmra.mrb[0].mxu0 %v1684
      %v1905 = vpop.f32.mrb[0].mxu0
      %v1906 = vadd.f32 %v1596, %v1905
      %v1907 = vpop.f32.mrb[0].mxu0
      %1908 = vmatprep.mubr.f32.mxu0 0.0
      %1909 = vmatmul.mubr.f32.gmra.mrb[0].mxu0 %v1687
      %v1910 = vpop.f32.mrb[0].mxu0
      %v1911 = vadd.f32 %v1596, %v1910
      %v1912 = vpop.f32.mrb[0].mxu0
      %1913 = vmatprep.mubr.f32.mxu0 0.0
      %1914 = vmatmul.mubr.f32.gmra.mrb[0].mxu0 %v1690
      %v1915 = vpop.f32.mrb[0].mxu0
      %v1916 = vadd.f32 %v1596, %v1915
      %v1917 = vpop.f32.mrb[0].mxu0
      %1918 = vmatprep.mubr.f32.mxu0 0.0
      %1919 = vmatmul.mubr.f32.gmra.mrb[0].mxu0 %v1693
      %v1920 = vpop.f32.mrb[0].mxu0
      %v1921 = vadd.f32 %v1596, %v1920
      %v1922 = vpop.f32.mrb[0].mxu0
      %1923 = vdwg.mxu0
      %1924 = vst [vmem:[%s194] sm:$0xff] %v1766
      %1925 = vst [vmem:[%s194 + $0x8] sm:$0xff] %v1771
      %1926 = vst [vmem:[%s194 + $0x10] sm:$0xff] %v1776
      %1927 = vst [vmem:[%s194 + $0x18] sm:$0xff] %v1781
      %1928 = vst [vmem:[%s194 + $0x20] sm:$0xff] %v1786
      %1929 = vst [vmem:[%s194 + $0x28] sm:$0xff] %v1791
      %1930 = vst [vmem:[%s194 + $0x30] sm:$0xff] %v1796
      %1931 = vst [vmem:[%s194 + $0x38] sm:$0xff] %v1801
      %1932 = vst [vmem:[%s194 + $0x40] sm:$0xff] %v1806
      %1933 = vst [vmem:[%s194 + $0x48] sm:$0xff] %v1811
      %1934 = vst [vmem:[%s194 + $0x50] sm:$0xff] %v1816
      %1935 = vst [vmem:[%s194 + $0x58] sm:$0xff] %v1821
      %1936 = vst [vmem:[%s194 + $0x60] sm:$0xff] %v1826
      %1937 = vst [vmem:[%s194 + $0x68] sm:$0xff] %v1831
      %1938 = vst [vmem:[%s194 + $0x70] sm:$0xff] %v1836
      %1939 = vst [vmem:[%s194 + $0x78] sm:$0xff] %v1841
      %1940 = vst [vmem:[%s194 + $0x80] sm:$0xff] %v1846
      %1941 = vst [vmem:[%s194 + $0x88] sm:$0xff] %v1851
      %1942 = vst [vmem:[%s194 + $0x90] sm:$0xff] %v1856
      %1943 = vst [vmem:[%s194 + $0x98] sm:$0xff] %v1861
      %1944 = vst [vmem:[%s194 + $0xa0] sm:$0xff] %v1866
      %1945 = vst [vmem:[%s194 + $0xa8] sm:$0xff] %v1871
      %1946 = vst [vmem:[%s194 + $0xb0] sm:$0xff] %v1876
      %1947 = vst [vmem:[%s194 + $0xb8] sm:$0xff] %v1881
      %1948 = vst [vmem:[%s194 + $0xc0] sm:$0xff] %v1886
      %1949 = vst [vmem:[%s194 + $0xc8] sm:$0xff] %v1891
      %1950 = vst [vmem:[%s194 + $0xd0] sm:$0xff] %v1896
      %1951 = vst [vmem:[%s194 + $0xd8] sm:$0xff] %v1901
      %1952 = vst [vmem:[%s194 + $0xe0] sm:$0xff] %v1906
      %1953 = vst [vmem:[%s194 + $0xe8] sm:$0xff] %v1911
      %1954 = vst [vmem:[%s194 + $0xf0] sm:$0xff] %v1916
      %1955 = vst [vmem:[%s194 + $0xf8] sm:$0xff] %v1921
      %s1956 = smul.u32 16, %s19
      %p1957 = scmp.lt.s32.totalorder %s18, 1
      %s1958 = scalar_select %p1957, %s18, 1
      %p1959 = scmp.lt.s32.totalorder %s1956, 15
      %s1960 = scalar_select %p1959, %s1956, 15
      %s1961 = smul.addr %s1960, 2
      %s1962 = smul.addr %s1958, 32
      %s1963 = sadd.s32 %s1961, %s1962
      %s1964 = smul.addr %s1963, 8
      %s1965 = scalar_lea.vmem %s3, %s1964
      // Predicated region
      $region33: #{absorbing_conv2d.1} parent=31 // pred_check
        %p1966 = pneg %p114
      $region34: #{absorbing_conv2d.1} parent=31 // pred_check_branch
        %1968 = sbr.rel (%p1966) target = $region36
      $region35: #{absorbing_conv2d.1} parent=31 // pred_region
        %s1969 = smul.u32 16, %s19
      $region36: #{absorbing_conv2d.1} parent=31 // pred_fallthru
        _
    $region32: #{absorbing_conv2d.1} parent=5 // pred_fallthru
      _
    %p1970 = scmp.le.s32.totalorder 2, %s9
    // Predicated region
    $region37: #{absorbing_conv2d.1} parent=5 // pred_check
      %p1971 = pneg %p1970
    $region38: #{absorbing_conv2d.1} parent=5 // pred_check_branch
      %1973 = sbr.rel (%p1971) target = $region40
    $region39: #{absorbing_conv2d.1} parent=5 // pred_region
      %s1974 = ssub.s32 %s9, 2
      // Predicated region
      $region41: #{absorbing_conv2d.1} parent=39 // pred_check
        %p1975 = pneg %p120
      $region42: #{absorbing_conv2d.1} parent=39 // pred_check_branch
        %1977 = sbr.rel (%p1975) target = $region44
      $region43: #{absorbing_conv2d.1} parent=39 // pred_region
        %s1978 = smul.u32 16, %s21
        %p1979 = scmp.lt.s32.totalorder %s20, 1
        %s1980 = scalar_select %p1979, %s20, 1
        %p1981 = scmp.lt.s32.totalorder %s1978, 15
        %s1982 = scalar_select %p1981, %s1978, 15
        %s1983 = smul.addr %s1982, 2
        %s1984 = smul.addr %s1980, 32
        %s1985 = sadd.s32 %s1983, %s1984
        %s1986 = smul.addr %s1985, 8
        %s1987 = scalar_lea.vmem %s3, %s1986
      $region44: #{absorbing_conv2d.1} parent=39 // pred_fallthru
        _
    $region40: #{absorbing_conv2d.1} parent=5 // pred_fallthru
      _
  $region6: #{absorbing_conv2d.1} parent=0 // loop_footer
    %s13 = sadd.s32 1, %s9
  $region7: #{absorbing_conv2d.1} parent=0 // loop_footer_branch
    %8 = sbr.rel target = $region3
  $region8: #{absorbing_conv2d.1} parent=0 // loop_exit
    _

</llo_original>
